<compile_context>
chip_gen: v7x
topology: tpu7x:2x2x1
jax: 0.10.0
libtpu: 0.0.40
codegen_flags: <defaults>
</compile_context>

<pallas_src>
import functools
import math
from itertools import product

import numpy as np
import jax
import jax.numpy as jnp
from jax.experimental import pallas as pl
from jax.experimental.pallas import tpu as pltpu

_LANE = 128
_EPS = float(np.finfo(np.float32).eps)
_LOG_EPS = math.log(_EPS)          # lower clamp of probs_to_logits in log space
_LOG1M_EPS = math.log1p(-_EPS)     # upper clamp
_NEG = -1.0e30                     # finite "minus infinity" for masked softmax lanes


def _round_up(v, m):
    return ((v + m - 1) // m) * m


def _mvae_kernel(x_ref, g_ref, ct_ref, cs_ref, lc_ref, w_ref, b_ref, out_ref,
                 *, inv_tau):
    f32, bf16 = jnp.float32, jnp.bfloat16

    # ---------------- encoder MLP: Linear+ReLU, Linear+ReLU, Linear ----------
    # bf16 operands on the MXU, f32 accumulation.  All tiles are (., 128).
    x = x_ref[...]                                                     # (Bt, P) bf16
    h = jnp.maximum(jnp.dot(x, w_ref[0], preferred_element_type=f32) + b_ref[0], 0.0)
    h = jnp.maximum(jnp.dot(h.astype(bf16), w_ref[1],
                            preferred_element_type=f32) + b_ref[1], 0.0)
    enc = jnp.dot(h.astype(bf16), w_ref[2], preferred_element_type=f32) + b_ref[2]
    # b_ref[2]'s padded lanes hold -1e30 -> zero mass in the softmax below.

    # ---------------- encoder Softmax fused with log: log-softmax ------------
    m = jnp.max(enc, axis=-1, keepdims=True)
    s = enc - m
    log_p = s - jnp.log(jnp.sum(jnp.exp(s), axis=-1, keepdims=True))   # (Bt, P)

    # ---------------- multinomial log-pmf on the MXU (f32) --------------------
    # log pmf[b,k] = log_coeff[k] + sum_l counts[k,l] * log p[b,l]
    # (padded rows of counts^T are exactly 0 so padded log_p lanes contribute 0)
    pow_sum = jnp.dot(log_p, ct_ref[...], preferred_element_type=f32)  # (Bt, Kp)

    # ---------------- probs_to_logits (clamp_probs + log), in log space ------
    logits = jnp.clip(pow_sum + lc_ref[...], _LOG_EPS, _LOG1M_EPS)     # (Bt, Kp)

    # ---------------- gumbel-softmax reparameterization ----------------------
    # Gumbel noise is supplied host-side; padded category columns carry -1e30
    # so padded z entries are exactly zero for any tau.
    y = (logits + g_ref[...]) * inv_tau
    ym = jnp.max(y, axis=-1, keepdims=True)
    ye = jnp.exp(y - ym)
    z = ye * pl.reciprocal(jnp.sum(ye, axis=-1, keepdims=True), approx=True)

    # ---------------- mean_z = z @ count_vectors / n_trials (pre-scaled) -----
    mean_z = jnp.dot(z, cs_ref[...], preferred_element_type=f32)       # (Bt, P)

    # ---------------- decoder MLP: Linear+ReLU, Linear+ReLU, Linear ----------
    h = jnp.maximum(jnp.dot(mean_z.astype(bf16), w_ref[3],
                            preferred_element_type=f32) + b_ref[3], 0.0)
    h = jnp.maximum(jnp.dot(h.astype(bf16), w_ref[4],
                            preferred_element_type=f32) + b_ref[4], 0.0)
    out = jnp.dot(h.astype(bf16), w_ref[5], preferred_element_type=f32) + b_ref[5]

    # Lane-dense (Bt, 128) store; wrapper slices to input_dim outside the kernel.
    out_ref[...] = out.astype(out_ref.dtype)


def _choose_batch_tiling(batch, block_max=1024):
    """Batch tile (multiple of 8, <= block_max) and padded batch size.

    Guarantees >= 2 grid steps whenever batch allows, so the "parallel" grid
    axis can shard across both v7x TensorCores.
    """
    b8 = _round_up(batch, 8)
    if b8 >= 16:
        block_b = min(_round_up(block_max, 8), _round_up((b8 + 1) // 2, 8))
    else:
        block_b = b8
    b_pad = _round_up(b8, block_b)
    return block_b, b_pad


def multinomial_vae_forward(x, gumbel, counts_T, counts_scaled, log_coeffs,
                            w_blob, b_blob, *, tau, block_b_max=1024):
    B, input_dim = x.shape
    K = gumbel.shape[-1]
    P = w_blob.shape[-1]
    Kp = counts_T.shape[-1]

    block_b, B_pad = _choose_batch_tiling(B, block_b_max)
    grid = (B_pad // block_b,)

    # Lane/batch padding (done by XLA outside the kernel, cheap plumbing).
    xp = jnp.zeros((B_pad, P), jnp.bfloat16).at[:B, :input_dim].set(
        x.astype(jnp.bfloat16))
    gp = jnp.full((B_pad, Kp), _NEG, jnp.float32).at[:B, :K].set(
        gumbel.astype(jnp.float32))

    resident = dict(pipeline_mode=pl.Buffered(1))   # grid-invariant: single buffer
    kernel = functools.partial(_mvae_kernel, inv_tau=1.0 / float(tau))
    out = pl.pallas_call(
        kernel,
        out_shape=jax.ShapeDtypeStruct((B_pad, P), jnp.float32),
        grid=grid,
        in_specs=[
            pl.BlockSpec((block_b, P), lambda i: (i, 0)),              # x (bf16)
            pl.BlockSpec((block_b, Kp), lambda i: (i, 0)),             # gumbel
            pl.BlockSpec((P, Kp), lambda i: (0, 0), **resident),       # counts^T
            pl.BlockSpec((Kp, P), lambda i: (0, 0), **resident),       # counts / n
            pl.BlockSpec((1, Kp), lambda i: (0, 0), **resident),       # log coeffs
            pl.BlockSpec((6, P, P), lambda i: (0, 0, 0), **resident),  # weights bf16
            pl.BlockSpec((6, 1, P), lambda i: (0, 0, 0), **resident),  # biases f32
        ],
        out_specs=pl.BlockSpec((block_b, P), lambda i: (i, 0)),        # lane-dense
        compiler_params=pltpu.CompilerParams(
            dimension_semantics=("parallel",),
            vmem_limit_bytes=32 * 1024 * 1024),
    )(xp, gp, counts_T, counts_scaled, log_coeffs, w_blob, b_blob)
    return out[:B, :input_dim]


def build_multinomial_tables(n_trials, latent_dim, pad_width):
    """Lane-padded multinomial tables plus un-padded copies for the reference."""
    cv = np.array([list(c) for c in product(range(n_trials + 1), repeat=latent_dim)
                   if sum(c) == n_trials], dtype=np.float32)            # (K, L)
    K = cv.shape[0]
    Kp = _round_up(K, _LANE)
    log_coeffs_real = (math.lgamma(n_trials + 1)
                       - np.array([sum(math.lgamma(c + 1.0) for c in row)
                                   for row in cv], dtype=np.float64)
                       ).astype(np.float32).reshape(1, K)

    counts_T = np.zeros((pad_width, Kp), np.float32)
    counts_T[:latent_dim, :K] = cv.T
    counts_scaled = np.zeros((Kp, pad_width), np.float32)
    counts_scaled[:K, :latent_dim] = cv / float(n_trials)               # fold 1/n
    log_coeffs = np.full((1, Kp), _NEG, np.float32)                     # pad = -1e30
    log_coeffs[0, :K] = log_coeffs_real[0]
    return (jnp.asarray(counts_T), jnp.asarray(counts_scaled),
            jnp.asarray(log_coeffs), cv, log_coeffs_real)


def init_packed_params(key, input_dim, hidden_dim, latent_dim, pad_width):
    """PyTorch-Linear-style init, packed into one bf16 weight blob + f32 bias blob."""
    dims = [(input_dim, hidden_dim), (hidden_dim, hidden_dim), (hidden_dim, latent_dim),
            (latent_dim, hidden_dim), (hidden_dim, hidden_dim), (hidden_dim, input_dim)]
    P = pad_width
    w_blob = np.zeros((6, P, P), np.float32)
    b_blob = np.zeros((6, 1, P), np.float32)
    for idx, (fan_in, fan_out) in enumerate(dims):
        key, kw, kb = jax.random.split(key, 3)
        bound = 1.0 / math.sqrt(fan_in)
        w = jax.random.uniform(kw, (fan_in, fan_out), jnp.float32, -bound, bound)
        b = jax.random.uniform(kb, (fan_out,), jnp.float32, -bound, bound)
        w_blob[idx, :fan_in, :fan_out] = np.asarray(w)
        b_blob[idx, 0, :fan_out] = np.asarray(b)
    # Mask the encoder head's padded lanes so they get zero softmax mass.
    b_blob[2, 0, latent_dim:] = _NEG
    # TODO(synk): for large real models (e.g. 784-in/512-hidden) the square
    # (6,P,P) blob over-pads ~3x; switch to per-layer (round8(fan_in),
    # round128(fan_out)) specs to stay inside v7x's 64 MiB VMEM.
    return jnp.asarray(w_blob).astype(jnp.bfloat16), jnp.asarray(b_blob)


def _reference_forward(x, gumbel, w_blob, b_blob, count_vectors, log_coeffs_real,
                       *, input_dim, hidden_dim, latent_dim, n_trials, tau):
    """Pure-JAX forward mirroring the PyTorch module (same bf16 weights)."""
    f32, bf16 = jnp.float32, jnp.bfloat16
    hp = jax.lax.Precision.HIGHEST
    dims = [(input_dim, hidden_dim), (hidden_dim, hidden_dim), (hidden_dim, latent_dim),
            (latent_dim, hidden_dim), (hidden_dim, hidden_dim), (hidden_dim, input_dim)]

    def lin(a, i):
        fi, fo = dims[i]
        return (jnp.dot(a.astype(bf16), w_blob[i, :fi, :fo],
                        preferred_element_type=f32, precision=hp)
                + b_blob[i, 0, :fo])

    h = jax.nn.relu(lin(x, 0))
    h = jax.nn.relu(lin(h, 1))
    log_p = jax.nn.log_softmax(lin(h, 2), axis=-1)
    counts = jnp.asarray(count_vectors, jnp.float32)                    # (K, L)
    pow_sum = jnp.dot(log_p, counts.T, precision=hp)
    logits = jnp.clip(pow_sum + jnp.asarray(log_coeffs_real), _LOG_EPS, _LOG1M_EPS)
    z = jax.nn.softmax((logits + gumbel) / tau, axis=-1)
    mean_z = jnp.dot(z, counts, precision=hp) / float(n_trials)
    h = jax.nn.relu(lin(mean_z, 3))
    h = jax.nn.relu(lin(h, 4))
    return lin(h, 5)


if __name__ == "__main__":
    # Small, forward-consistent sizes (hidden_amount = 2 -> 3 Linear layers/MLP).
    B = 16
    input_dim = 16
    hidden_dim = 32
    latent_dim = 3
    n_trials = 4
    tau = 0.01                       # module default

    P = _round_up(max(input_dim, hidden_dim, latent_dim), _LANE)   # 128

    key = jax.random.PRNGKey(0)
    key, kx, kg, kp = jax.random.split(key, 4)

    w_blob, b_blob = init_packed_params(kp, input_dim, hidden_dim, latent_dim, P)
    (counts_T, counts_scaled, log_coeffs, cv, lc_real) = build_multinomial_tables(
        n_trials, latent_dim, P)
    K = cv.shape[0]                                                 # C(6,2) = 15

    x = jax.random.normal(kx, (B, input_dim), jnp.float32)
    # TODO(synk): Gumbel noise generated host-side with jax.random (deterministic),
    # distributionally equivalent to torch's -log(-log(rand)) but not bit-identical.
    gumbel = jax.random.gumbel(kg, (B, K), jnp.float32)

    # TODO(synk): latent_dim == 1 (Sigmoid encoder head) path not implemented;
    # this kernel covers the latent_dim > 1 (Softmax) branch of the module.

    # --- correctness check vs. pure-JAX reference in a smooth-softmax regime
    #     (tau=1.0 avoids the near-argmax 1/tau amplification that makes a max-
    #     error comparison across matmul precisions fragile).
    out_chk = jax.block_until_ready(
        multinomial_vae_forward(x, gumbel, counts_T, counts_scaled, log_coeffs,
                                w_blob, b_blob, tau=1.0))
    ref_chk = jax.block_until_ready(
        _reference_forward(x, gumbel, w_blob, b_blob, cv, lc_real,
                           input_dim=input_dim, hidden_dim=hidden_dim,
                           latent_dim=latent_dim, n_trials=n_trials, tau=1.0))
    assert out_chk.shape == (B, input_dim)
    assert float(jnp.max(jnp.abs(out_chk - ref_chk))) < 5e-2, "kernel/ref mismatch"

    # --- run at the module's default tau (near-argmax gumbel-softmax).
    out = jax.block_until_ready(
        multinomial_vae_forward(x, gumbel, counts_T, counts_scaled, log_coeffs,
                                w_blob, b_blob, tau=tau))
    assert out.shape == (B, input_dim) and bool(jnp.all(jnp.isfinite(out)))
    print("KERNEL_OK")
</pallas_src>

<mosaic_0001>
module attributes {stable_mosaic.version = 11 : i64} {
  func.func @_mvae_kernel(%arg0: i32, %arg1: memref<8x128xbf16, #tpu.memory_space<vmem>>, %arg2: memref<8x128xf32, #tpu.memory_space<vmem>>, %arg3: memref<128x128xf32, #tpu.memory_space<vmem>>, %arg4: memref<128x128xf32, #tpu.memory_space<vmem>>, %arg5: memref<1x128xf32, #tpu.memory_space<vmem>>, %arg6: memref<6x128x128xbf16, #tpu.memory_space<vmem>>, %arg7: memref<6x1x128xf32, #tpu.memory_space<vmem>>, %arg8: memref<8x128xf32, #tpu.memory_space<vmem>>) attributes {dimension_semantics = [#tpu.dimension_semantics<parallel>], iteration_bounds = array<i64: 2>, scalar_prefetch = 0 : i64, scratch_operands = 0 : i64, tpu.core_type = #tpu.core_type<tc>, window_params = [{transform_indices = @transform_0, window_bounds = array<i64: 8, 128>}, {transform_indices = @transform_1, window_bounds = array<i64: 8, 128>}, {pipeline_mode = #tpu.pipeline_mode<synchronous>, transform_indices = @transform_2, window_bounds = array<i64: 128, 128>}, {pipeline_mode = #tpu.pipeline_mode<synchronous>, transform_indices = @transform_3, window_bounds = array<i64: 128, 128>}, {pipeline_mode = #tpu.pipeline_mode<synchronous>, transform_indices = @transform_4, window_bounds = array<i64: 1, 128>}, {pipeline_mode = #tpu.pipeline_mode<synchronous>, transform_indices = @transform_5, window_bounds = array<i64: 6, 128, 128>}, {pipeline_mode = #tpu.pipeline_mode<synchronous>, transform_indices = @transform_6, window_bounds = array<i64: 6, 1, 128>}, {transform_indices = @transform_7, window_bounds = array<i64: 8, 128>}]} {
    %c0 = arith.constant 0 : index
    %c0_0 = arith.constant 0 : index
    %0 = vector.load %arg1[%c0, %c0_0] : memref<8x128xbf16, #tpu.memory_space<vmem>>, vector<8x128xbf16>
    %c0_1 = arith.constant 0 : index
    %c0_2 = arith.constant 0 : index
    %c0_3 = arith.constant 0 : index
    %1 = vector.load %arg6[%c0_1, %c0_2, %c0_3] : memref<6x128x128xbf16, #tpu.memory_space<vmem>>, vector<1x128x128xbf16>
    %2 = vector.shape_cast %1 : vector<1x128x128xbf16> to vector<128x128xbf16>
    %cst = arith.constant dense<0.000000e+00> : vector<8x128xf32>
    %3 = tpu.matmul %0, %2, %cst {dimension_numbers = #tpu.dot_dimension_numbers<[1], [0], [0], [1], [0, 0, 1, 1], [], []>} : vector<8x128xbf16>, vector<128x128xbf16>, vector<8x128xf32> -> vector<8x128xf32>
    %c0_4 = arith.constant 0 : index
    %c0_5 = arith.constant 0 : index
    %c0_6 = arith.constant 0 : index
    %4 = vector.load %arg7[%c0_4, %c0_5, %c0_6] : memref<6x1x128xf32, #tpu.memory_space<vmem>>, vector<1x1x128xf32>
    %5 = vector.shape_cast %4 : vector<1x1x128xf32> to vector<1x128xf32>
    %6 = vector.broadcast %5 : vector<1x128xf32> to vector<8x128xf32>
    %7 = arith.addf %3, %6 : vector<8x128xf32>
    %cst_7 = arith.constant 0.000000e+00 : f32
    %8 = vector.broadcast %cst_7 : f32 to vector<8x128xf32>
    %9 = arith.maximumf %7, %8 : vector<8x128xf32>
    %10 = arith.truncf %9 : vector<8x128xf32> to vector<8x128xbf16>
    %c1 = arith.constant 1 : index
    %c0_8 = arith.constant 0 : index
    %c0_9 = arith.constant 0 : index
    %11 = vector.load %arg6[%c1, %c0_8, %c0_9] : memref<6x128x128xbf16, #tpu.memory_space<vmem>>, vector<1x128x128xbf16>
    %12 = vector.shape_cast %11 : vector<1x128x128xbf16> to vector<128x128xbf16>
    %cst_10 = arith.constant dense<0.000000e+00> : vector<8x128xf32>
    %13 = tpu.matmul %10, %12, %cst_10 {dimension_numbers = #tpu.dot_dimension_numbers<[1], [0], [0], [1], [0, 0, 1, 1], [], []>} : vector<8x128xbf16>, vector<128x128xbf16>, vector<8x128xf32> -> vector<8x128xf32>
    %c1_11 = arith.constant 1 : index
    %c0_12 = arith.constant 0 : index
    %c0_13 = arith.constant 0 : index
    %14 = vector.load %arg7[%c1_11, %c0_12, %c0_13] : memref<6x1x128xf32, #tpu.memory_space<vmem>>, vector<1x1x128xf32>
    %15 = vector.shape_cast %14 : vector<1x1x128xf32> to vector<1x128xf32>
    %16 = vector.broadcast %15 : vector<1x128xf32> to vector<8x128xf32>
    %17 = arith.addf %13, %16 : vector<8x128xf32>
    %cst_14 = arith.constant 0.000000e+00 : f32
    %18 = vector.broadcast %cst_14 : f32 to vector<8x128xf32>
    %19 = arith.maximumf %17, %18 : vector<8x128xf32>
    %20 = arith.truncf %19 : vector<8x128xf32> to vector<8x128xbf16>
    %c2 = arith.constant 2 : index
    %c0_15 = arith.constant 0 : index
    %c0_16 = arith.constant 0 : index
    %21 = vector.load %arg6[%c2, %c0_15, %c0_16] : memref<6x128x128xbf16, #tpu.memory_space<vmem>>, vector<1x128x128xbf16>
    %22 = vector.shape_cast %21 : vector<1x128x128xbf16> to vector<128x128xbf16>
    %cst_17 = arith.constant dense<0.000000e+00> : vector<8x128xf32>
    %23 = tpu.matmul %20, %22, %cst_17 {dimension_numbers = #tpu.dot_dimension_numbers<[1], [0], [0], [1], [0, 0, 1, 1], [], []>} : vector<8x128xbf16>, vector<128x128xbf16>, vector<8x128xf32> -> vector<8x128xf32>
    %c2_18 = arith.constant 2 : index
    %c0_19 = arith.constant 0 : index
    %c0_20 = arith.constant 0 : index
    %24 = vector.load %arg7[%c2_18, %c0_19, %c0_20] : memref<6x1x128xf32, #tpu.memory_space<vmem>>, vector<1x1x128xf32>
    %25 = vector.shape_cast %24 : vector<1x1x128xf32> to vector<1x128xf32>
    %26 = vector.broadcast %25 : vector<1x128xf32> to vector<8x128xf32>
    %27 = arith.addf %23, %26 : vector<8x128xf32>
    %cst_21 = arith.constant dense<0xFF800000> : vector<8xf32>
    %28 = vector.multi_reduction <maximumf>, %27, %cst_21 [1] : vector<8x128xf32> to vector<8xf32>
    %29 = vector.shape_cast %28 : vector<8xf32> to vector<8x1xf32>
    %30 = vector.broadcast %29 : vector<8x1xf32> to vector<8x128xf32>
    %31 = arith.subf %27, %30 : vector<8x128xf32>
    %32 = math.exp %31 : vector<8x128xf32>
    %cst_22 = arith.constant dense<0.000000e+00> : vector<8xf32>
    %33 = vector.multi_reduction <add>, %32, %cst_22 [1] : vector<8x128xf32> to vector<8xf32>
    %34 = vector.shape_cast %33 : vector<8xf32> to vector<8x1xf32>
    %35 = math.log %34 : vector<8x1xf32>
    %36 = vector.broadcast %35 : vector<8x1xf32> to vector<8x128xf32>
    %37 = arith.subf %31, %36 : vector<8x128xf32>
    %c0_23 = arith.constant 0 : index
    %c0_24 = arith.constant 0 : index
    %38 = vector.load %arg3[%c0_23, %c0_24] : memref<128x128xf32, #tpu.memory_space<vmem>>, vector<128x128xf32>
    %cst_25 = arith.constant dense<0.000000e+00> : vector<8x128xf32>
    %39 = tpu.matmul %37, %38, %cst_25 {dimension_numbers = #tpu.dot_dimension_numbers<[1], [0], [0], [1], [0, 0, 1, 1], [], []>} : vector<8x128xf32>, vector<128x128xf32>, vector<8x128xf32> -> vector<8x128xf32>
    %c0_26 = arith.constant 0 : index
    %c0_27 = arith.constant 0 : index
    %40 = vector.load %arg5[%c0_26, %c0_27] : memref<1x128xf32, #tpu.memory_space<vmem>>, vector<1x128xf32>
    %41 = vector.broadcast %40 : vector<1x128xf32> to vector<8x128xf32>
    %42 = arith.addf %39, %41 : vector<8x128xf32>
    %cst_28 = arith.constant -15.9423847 : f32
    %cst_29 = arith.constant -1.19209304E-7 : f32
    %43 = vector.broadcast %cst_28 : f32 to vector<8x128xf32>
    %44 = arith.maximumf %43, %42 : vector<8x128xf32>
    %45 = vector.broadcast %cst_29 : f32 to vector<8x128xf32>
    %46 = arith.minimumf %45, %44 : vector<8x128xf32>
    %c0_30 = arith.constant 0 : index
    %c0_31 = arith.constant 0 : index
    %47 = vector.load %arg2[%c0_30, %c0_31] : memref<8x128xf32, #tpu.memory_space<vmem>>, vector<8x128xf32>
    %48 = arith.addf %46, %47 : vector<8x128xf32>
    %cst_32 = arith.constant 1.000000e+00 : f32
    %49 = vector.broadcast %cst_32 : f32 to vector<8x128xf32>
    %50 = arith.mulf %48, %49 : vector<8x128xf32>
    %cst_33 = arith.constant dense<0xFF800000> : vector<8xf32>
    %51 = vector.multi_reduction <maximumf>, %50, %cst_33 [1] : vector<8x128xf32> to vector<8xf32>
    %52 = vector.shape_cast %51 : vector<8xf32> to vector<8x1xf32>
    %53 = vector.broadcast %52 : vector<8x1xf32> to vector<8x128xf32>
    %54 = arith.subf %50, %53 : vector<8x128xf32>
    %55 = math.exp %54 : vector<8x128xf32>
    %cst_34 = arith.constant dense<0.000000e+00> : vector<8xf32>
    %56 = vector.multi_reduction <add>, %55, %cst_34 [1] : vector<8x128xf32> to vector<8xf32>
    %57 = vector.shape_cast %56 : vector<8xf32> to vector<8x1xf32>
    %58 = tpu.reciprocal %57 {approx = true} : vector<8x1xf32> -> vector<8x1xf32>
    %59 = vector.broadcast %58 : vector<8x1xf32> to vector<8x128xf32>
    %60 = arith.mulf %55, %59 : vector<8x128xf32>
    %c0_35 = arith.constant 0 : index
    %c0_36 = arith.constant 0 : index
    %61 = vector.load %arg4[%c0_35, %c0_36] : memref<128x128xf32, #tpu.memory_space<vmem>>, vector<128x128xf32>
    %cst_37 = arith.constant dense<0.000000e+00> : vector<8x128xf32>
    %62 = tpu.matmul %60, %61, %cst_37 {dimension_numbers = #tpu.dot_dimension_numbers<[1], [0], [0], [1], [0, 0, 1, 1], [], []>} : vector<8x128xf32>, vector<128x128xf32>, vector<8x128xf32> -> vector<8x128xf32>
    %63 = arith.truncf %62 : vector<8x128xf32> to vector<8x128xbf16>
    %c3 = arith.constant 3 : index
    %c0_38 = arith.constant 0 : index
    %c0_39 = arith.constant 0 : index
    %64 = vector.load %arg6[%c3, %c0_38, %c0_39] : memref<6x128x128xbf16, #tpu.memory_space<vmem>>, vector<1x128x128xbf16>
    %65 = vector.shape_cast %64 : vector<1x128x128xbf16> to vector<128x128xbf16>
    %cst_40 = arith.constant dense<0.000000e+00> : vector<8x128xf32>
    %66 = tpu.matmul %63, %65, %cst_40 {dimension_numbers = #tpu.dot_dimension_numbers<[1], [0], [0], [1], [0, 0, 1, 1], [], []>} : vector<8x128xbf16>, vector<128x128xbf16>, vector<8x128xf32> -> vector<8x128xf32>
    %c3_41 = arith.constant 3 : index
    %c0_42 = arith.constant 0 : index
    %c0_43 = arith.constant 0 : index
    %67 = vector.load %arg7[%c3_41, %c0_42, %c0_43] : memref<6x1x128xf32, #tpu.memory_space<vmem>>, vector<1x1x128xf32>
    %68 = vector.shape_cast %67 : vector<1x1x128xf32> to vector<1x128xf32>
    %69 = vector.broadcast %68 : vector<1x128xf32> to vector<8x128xf32>
    %70 = arith.addf %66, %69 : vector<8x128xf32>
    %cst_44 = arith.constant 0.000000e+00 : f32
    %71 = vector.broadcast %cst_44 : f32 to vector<8x128xf32>
    %72 = arith.maximumf %70, %71 : vector<8x128xf32>
    %73 = arith.truncf %72 : vector<8x128xf32> to vector<8x128xbf16>
    %c4 = arith.constant 4 : index
    %c0_45 = arith.constant 0 : index
    %c0_46 = arith.constant 0 : index
    %74 = vector.load %arg6[%c4, %c0_45, %c0_46] : memref<6x128x128xbf16, #tpu.memory_space<vmem>>, vector<1x128x128xbf16>
    %75 = vector.shape_cast %74 : vector<1x128x128xbf16> to vector<128x128xbf16>
    %cst_47 = arith.constant dense<0.000000e+00> : vector<8x128xf32>
    %76 = tpu.matmul %73, %75, %cst_47 {dimension_numbers = #tpu.dot_dimension_numbers<[1], [0], [0], [1], [0, 0, 1, 1], [], []>} : vector<8x128xbf16>, vector<128x128xbf16>, vector<8x128xf32> -> vector<8x128xf32>
    %c4_48 = arith.constant 4 : index
    %c0_49 = arith.constant 0 : index
    %c0_50 = arith.constant 0 : index
    %77 = vector.load %arg7[%c4_48, %c0_49, %c0_50] : memref<6x1x128xf32, #tpu.memory_space<vmem>>, vector<1x1x128xf32>
    %78 = vector.shape_cast %77 : vector<1x1x128xf32> to vector<1x128xf32>
    %79 = vector.broadcast %78 : vector<1x128xf32> to vector<8x128xf32>
    %80 = arith.addf %76, %79 : vector<8x128xf32>
    %cst_51 = arith.constant 0.000000e+00 : f32
    %81 = vector.broadcast %cst_51 : f32 to vector<8x128xf32>
    %82 = arith.maximumf %80, %81 : vector<8x128xf32>
    %83 = arith.truncf %82 : vector<8x128xf32> to vector<8x128xbf16>
    %c5 = arith.constant 5 : index
    %c0_52 = arith.constant 0 : index
    %c0_53 = arith.constant 0 : index
    %84 = vector.load %arg6[%c5, %c0_52, %c0_53] : memref<6x128x128xbf16, #tpu.memory_space<vmem>>, vector<1x128x128xbf16>
    %85 = vector.shape_cast %84 : vector<1x128x128xbf16> to vector<128x128xbf16>
    %cst_54 = arith.constant dense<0.000000e+00> : vector<8x128xf32>
    %86 = tpu.matmul %83, %85, %cst_54 {dimension_numbers = #tpu.dot_dimension_numbers<[1], [0], [0], [1], [0, 0, 1, 1], [], []>} : vector<8x128xbf16>, vector<128x128xbf16>, vector<8x128xf32> -> vector<8x128xf32>
    %c5_55 = arith.constant 5 : index
    %c0_56 = arith.constant 0 : index
    %c0_57 = arith.constant 0 : index
    %87 = vector.load %arg7[%c5_55, %c0_56, %c0_57] : memref<6x1x128xf32, #tpu.memory_space<vmem>>, vector<1x1x128xf32>
    %88 = vector.shape_cast %87 : vector<1x1x128xf32> to vector<1x128xf32>
    %89 = vector.broadcast %88 : vector<1x128xf32> to vector<8x128xf32>
    %90 = arith.addf %86, %89 : vector<8x128xf32>
    %c0_58 = arith.constant 0 : index
    %c0_59 = arith.constant 0 : index
    %91 = vector.load %arg8[%c0_58, %c0_59] : memref<8x128xf32, #tpu.memory_space<vmem>>, vector<8x128xf32>
    tpu.vector_store %arg8[%c0_58, %c0_59], %90 {strides = array<i32>} : memref<8x128xf32, #tpu.memory_space<vmem>>, vector<8x128xf32>,
    return
  }
  func.func @transform_0(%arg0: i32) -> (i32, i32) {
    %c0_i32 = arith.constant 0 : i32
    %c0_i32_0 = arith.constant 0 : i32
    return %arg0, %c0_i32 : i32, i32
  }
  func.func @transform_1(%arg0: i32) -> (i32, i32) {
    %c0_i32 = arith.constant 0 : i32
    %c0_i32_0 = arith.constant 0 : i32
    return %arg0, %c0_i32 : i32, i32
  }
  func.func @transform_2(%arg0: i32) -> (i32, i32) {
    %c0_i32 = arith.constant 0 : i32
    %c0_i32_0 = arith.constant 0 : i32
    %c0_i32_1 = arith.constant 0 : i32
    return %c0_i32, %c0_i32_0 : i32, i32
  }
  func.func @transform_3(%arg0: i32) -> (i32, i32) {
    %c0_i32 = arith.constant 0 : i32
    %c0_i32_0 = arith.constant 0 : i32
    %c0_i32_1 = arith.constant 0 : i32
    return %c0_i32, %c0_i32_0 : i32, i32
  }
  func.func @transform_4(%arg0: i32) -> (i32, i32) {
    %c0_i32 = arith.constant 0 : i32
    %c0_i32_0 = arith.constant 0 : i32
    %c0_i32_1 = arith.constant 0 : i32
    return %c0_i32, %c0_i32_0 : i32, i32
  }
  func.func @transform_5(%arg0: i32) -> (i32, i32, i32) {
    %c0_i32 = arith.constant 0 : i32
    %c0_i32_0 = arith.constant 0 : i32
    %c0_i32_1 = arith.constant 0 : i32
    %c0_i32_2 = arith.constant 0 : i32
    return %c0_i32, %c0_i32_0, %c0_i32_1 : i32, i32, i32
  }
  func.func @transform_6(%arg0: i32) -> (i32, i32, i32) {
    %c0_i32 = arith.constant 0 : i32
    %c0_i32_0 = arith.constant 0 : i32
    %c0_i32_1 = arith.constant 0 : i32
    %c0_i32_2 = arith.constant 0 : i32
    return %c0_i32, %c0_i32_0, %c0_i32_1 : i32, i32, i32
  }
  func.func @transform_7(%arg0: i32) -> (i32, i32) {
    %c0_i32 = arith.constant 0 : i32
    %c0_i32_0 = arith.constant 0 : i32
    return %arg0, %c0_i32 : i32, i32
  }
}

</mosaic_0001>

<llo_original>
// kernel: tpu_custom_call.1
$region0: #{tpu_custom_call.1}
  #allocation0 [shape = 'u32[]', space=smem, size = 0x4, offset = 0x4, fixed_abs, tag = 'smem constant byte address 0x4 - core index']
  #allocation1 [shape = 'u32[144,128]{1,0:T(1,128)}', space=vmem, size = 0x12000, scoped, tag = 'internal scratch']
  %s0 = inlined_call_operand.hbm [shape: bf16[16,128], index: 0, kind: input, shape index: {}]
  %s1 = inlined_call_operand.hbm [shape: f32[16,128], index: 1, kind: input, shape index: {}]
  %s2 = inlined_call_operand.hbm [shape: f32[128,128], index: 2, kind: input, shape index: {}]
  %s3 = inlined_call_operand.hbm [shape: f32[128,128], index: 3, kind: input, shape index: {}]
  %s4 = inlined_call_operand.vmem [shape: f32[1,128], index: 4, kind: input, shape index: {}]
  %s5 = inlined_call_operand.hbm [shape: bf16[6,128,128], index: 5, kind: input, shape index: {}]
  %s6 = inlined_call_operand.vmem [shape: f32[6,1,128], index: 6, kind: input, shape index: {}]
  %s7 = inlined_call_operand.hbm [shape: f32[16,128], index: 7, kind: output, shape index: {}]
  %s8 = sld [smem:[#allocation0]]
  $region81: #{tpu_custom_call.1} parent=0
    _
  %s10 = ssub.s32 1, %s8
  %s11 = scalar_select 0, %s10, %s8
  $region1: #{tpu_custom_call.1} parent=0
    #allocation2 [shape = 'u8[4096]{0}', space=vmem, size = 0x1000, scoped, tag = 'input window, operand 0']
    #allocation3 [shape = 's32[2]{0}', space=sflag, size = 0x8, scoped, tag = 'scoped memory for tpu_custom_call.1']
    #allocation4 [shape = 's32[2]{0}', space=sflag, size = 0x8, scoped, tag = 'scoped memory for tpu_custom_call.1']
    #allocation5 [shape = 'u8[8192]{0}', space=vmem, size = 0x2000, scoped, tag = 'input window, operand 1']
    #allocation6 [shape = 's32[2]{0}', space=sflag, size = 0x8, scoped, tag = 'scoped memory for tpu_custom_call.1']
    #allocation7 [shape = 'u8[65536]{0}', space=vmem, size = 0x10000, scoped, tag = 'input window, operand 2, single buffered']
    #allocation8 [shape = 'u8[65536]{0}', space=vmem, size = 0x10000, scoped, tag = 'input window, operand 3, single buffered']
    #allocation9 [shape = 's32[1]{0}', space=sflag, size = 0x4, scoped, tag = 'scoped memory for tpu_custom_call.1']
    #allocation10 [shape = 'u8[196608]{0}', space=vmem, size = 0x30000, scoped, tag = 'input window, operand 5, single buffered']
    #allocation11 [shape = 'u8[8192]{0}', space=vmem, size = 0x2000, scoped, tag = 'output window, operand 0']
    %12 = vsyncpa [#allocation3], 0
    %s13 = scalar_lea.sflag [#allocation3], 1
    %14 = vsyncpa %s13, 0
    %15 = vsyncpa [#allocation6], 0
    %s16 = scalar_lea.sflag [#allocation6], 1
    %17 = vsyncpa %s16, 0
    %18 = vsyncpa [#allocation9], 0
    %19 = vsyncpa [#allocation4], 0
    %s20 = scalar_lea.sflag [#allocation4], 1
    %21 = vsyncpa %s20, 0
    loop: start=0, step=1, limit=4
    $region2: #{tpu_custom_call.1} parent=1 // loop_pre_header
      _
    $region3: #{tpu_custom_call.1} parent=1 // loop_header
      %s23 = sphi 0, %s27
      %p24 = scmp.ge.s32.totalorder %s23, 4
      %s33 = sphi 0, %s35
      %s36 = sphi 0, %s33
      %s37 = sphi 0, %s36
      %s53 = sphi 0, %s37
      %s59 = sphi 0, %s61
      %s62 = sphi 0, %s59
      %s63 = sphi 0, %s62
      %s79 = sphi 0, %s63
      %s83 = sphi 0, %s83
      %s85 = sphi 0, %s83
      %s86 = sphi 0, %s85
      %s100 = sphi 0, %s86
      %s104 = sphi 0, %s104
      %s106 = sphi 0, %s104
      %s107 = sphi 0, %s106
      %s121 = sphi 0, %s107
      %s125 = sphi 0, %s125
      %s127 = sphi 0, %s125
      %s128 = sphi 0, %s127
      %s142 = sphi 0, %s128
      %s146 = sphi 0, %s146
      %s148 = sphi 0, %s146
      %s149 = sphi 0, %s148
      %s163 = sphi 0, %s149
      %s167 = sphi 0, %s167
      %s169 = sphi 0, %s167
      %s170 = sphi 0, %s169
      %s184 = sphi 0, %s170
      %s190 = sphi 0, %s192
      %s193 = sphi 0, %s190
      %s194 = sphi 0, %s193
      %s210 = sphi 0, %s194
    $region4: #{tpu_custom_call.1} parent=1 // loop_header_branch
      %26 = sbr.rel (%p24) target = $region8
    $region5: #{tpu_custom_call.1} parent=1 // loop_body
      %s28 = ssub.s32 %s23, 1
      %s29 = ssub.s32 %s23, 2
      %s30 = sadd.s32 %s23, 1
      %s31 = ssub.s32 %s23, %s30
      %p32 = scmp.eq.s32.totalorder %s31, 0
      %s34 = sadd.s32 %s33, 1
      %s35 = scalar_select %p32, %s33, %s34
      %p38 = pneg %p32
      %p39 = scmp.eq.s32.totalorder %s23, 1
      %p40 = por %p38, %p39
      %p41 = scmp.ne.s32.totalorder %s33, %s36
      %p42 = scmp.eq.s32.totalorder %s23, 0
      %p43 = por %p41, %p42
      %p44 = scmp.ne.s32.totalorder %s33, %s36
      %p45 = scmp.eq.s32.totalorder %s28, 1
      %p46 = por %p44, %p45
      %p47 = scmp.ne.s32.totalorder %s36, %s37
      %p48 = scmp.eq.s32.totalorder %s28, 0
      %p49 = por %p47, %p48
      %p50 = scmp.ne.s32.totalorder %s36, %s37
      %p51 = scmp.eq.s32.totalorder %s29, 1
      %p52 = por %p50, %p51
      %p54 = scmp.ne.s32.totalorder %s37, %s53
      %p55 = scmp.eq.s32.totalorder %s29, 0
      %p56 = por %p54, %p55
      %s57 = ssub.s32 %s23, %s30
      %p58 = scmp.eq.s32.totalorder %s57, 0
      %s60 = sadd.s32 %s59, 1
      %s61 = scalar_select %p58, %s59, %s60
      %p64 = pneg %p58
      %p65 = scmp.eq.s32.totalorder %s23, 1
      %p66 = por %p64, %p65
      %p67 = scmp.ne.s32.totalorder %s59, %s62
      %p68 = scmp.eq.s32.totalorder %s23, 0
      %p69 = por %p67, %p68
      %p70 = scmp.ne.s32.totalorder %s59, %s62
      %p71 = scmp.eq.s32.totalorder %s28, 1
      %p72 = por %p70, %p71
      %p73 = scmp.ne.s32.totalorder %s62, %s63
      %p74 = scmp.eq.s32.totalorder %s28, 0
      %p75 = por %p73, %p74
      %p76 = scmp.ne.s32.totalorder %s62, %s63
      %p77 = scmp.eq.s32.totalorder %s29, 1
      %p78 = por %p76, %p77
      %p80 = scmp.ne.s32.totalorder %s63, %s79
      %p81 = scmp.eq.s32.totalorder %s29, 0
      %p82 = por %p80, %p81
      %s84 = sadd.s32 %s83, 1
      %p87 = scmp.eq.s32.totalorder %s23, 1
      %p88 = scmp.ne.s32.totalorder %s83, %s85
      %p89 = scmp.eq.s32.totalorder %s23, 0
      %p90 = por %p88, %p89
      %p91 = scmp.ne.s32.totalorder %s83, %s85
      %p92 = scmp.eq.s32.totalorder %s28, 1
      %p93 = por %p91, %p92
      %p94 = scmp.ne.s32.totalorder %s85, %s86
      %p95 = scmp.eq.s32.totalorder %s28, 0
      %p96 = por %p94, %p95
      %p97 = scmp.ne.s32.totalorder %s85, %s86
      %p98 = scmp.eq.s32.totalorder %s29, 1
      %p99 = por %p97, %p98
      %p101 = scmp.ne.s32.totalorder %s86, %s100
      %p102 = scmp.eq.s32.totalorder %s29, 0
      %p103 = por %p101, %p102
      %s105 = sadd.s32 %s104, 1
      %p108 = scmp.eq.s32.totalorder %s23, 1
      %p109 = scmp.ne.s32.totalorder %s104, %s106
      %p110 = scmp.eq.s32.totalorder %s23, 0
      %p111 = por %p109, %p110
      %p112 = scmp.ne.s32.totalorder %s104, %s106
      %p113 = scmp.eq.s32.totalorder %s28, 1
      %p114 = por %p112, %p113
      %p115 = scmp.ne.s32.totalorder %s106, %s107
      %p116 = scmp.eq.s32.totalorder %s28, 0
      %p117 = por %p115, %p116
      %p118 = scmp.ne.s32.totalorder %s106, %s107
      %p119 = scmp.eq.s32.totalorder %s29, 1
      %p120 = por %p118, %p119
      %p122 = scmp.ne.s32.totalorder %s107, %s121
      %p123 = scmp.eq.s32.totalorder %s29, 0
      %p124 = por %p122, %p123
      %s126 = sadd.s32 %s125, 1
      %p129 = scmp.eq.s32.totalorder %s23, 1
      %p130 = scmp.ne.s32.totalorder %s125, %s127
      %p131 = scmp.eq.s32.totalorder %s23, 0
      %p132 = por %p130, %p131
      %p133 = scmp.ne.s32.totalorder %s125, %s127
      %p134 = scmp.eq.s32.totalorder %s28, 1
      %p135 = por %p133, %p134
      %p136 = scmp.ne.s32.totalorder %s127, %s128
      %p137 = scmp.eq.s32.totalorder %s28, 0
      %p138 = por %p136, %p137
      %p139 = scmp.ne.s32.totalorder %s127, %s128
      %p140 = scmp.eq.s32.totalorder %s29, 1
      %p141 = por %p139, %p140
      %p143 = scmp.ne.s32.totalorder %s128, %s142
      %p144 = scmp.eq.s32.totalorder %s29, 0
      %p145 = por %p143, %p144
      %s147 = sadd.s32 %s146, 1
      %p150 = scmp.eq.s32.totalorder %s23, 1
      %p151 = scmp.ne.s32.totalorder %s146, %s148
      %p152 = scmp.eq.s32.totalorder %s23, 0
      %p153 = por %p151, %p152
      %p154 = scmp.ne.s32.totalorder %s146, %s148
      %p155 = scmp.eq.s32.totalorder %s28, 1
      %p156 = por %p154, %p155
      %p157 = scmp.ne.s32.totalorder %s148, %s149
      %p158 = scmp.eq.s32.totalorder %s28, 0
      %p159 = por %p157, %p158
      %p160 = scmp.ne.s32.totalorder %s148, %s149
      %p161 = scmp.eq.s32.totalorder %s29, 1
      %p162 = por %p160, %p161
      %p164 = scmp.ne.s32.totalorder %s149, %s163
      %p165 = scmp.eq.s32.totalorder %s29, 0
      %p166 = por %p164, %p165
      %s168 = sadd.s32 %s167, 1
      %p171 = scmp.eq.s32.totalorder %s23, 1
      %p172 = scmp.ne.s32.totalorder %s167, %s169
      %p173 = scmp.eq.s32.totalorder %s23, 0
      %p174 = por %p172, %p173
      %p175 = scmp.ne.s32.totalorder %s167, %s169
      %p176 = scmp.eq.s32.totalorder %s28, 1
      %p177 = por %p175, %p176
      %p178 = scmp.ne.s32.totalorder %s169, %s170
      %p179 = scmp.eq.s32.totalorder %s28, 0
      %p180 = por %p178, %p179
      %p181 = scmp.ne.s32.totalorder %s169, %s170
      %p182 = scmp.eq.s32.totalorder %s29, 1
      %p183 = por %p181, %p182
      %p185 = scmp.ne.s32.totalorder %s170, %s184
      %p186 = scmp.eq.s32.totalorder %s29, 0
      %p187 = por %p185, %p186
      %s188 = ssub.s32 %s23, %s30
      %p189 = scmp.eq.s32.totalorder %s188, 0
      %s191 = sadd.s32 %s190, 1
      %s192 = scalar_select %p189, %s190, %s191
      %p195 = pneg %p189
      %p196 = scmp.eq.s32.totalorder %s23, 1
      %p197 = por %p195, %p196
      %p198 = scmp.ne.s32.totalorder %s190, %s193
      %p199 = scmp.eq.s32.totalorder %s23, 0
      %p200 = por %p198, %p199
      %p201 = scmp.ne.s32.totalorder %s190, %s193
      %p202 = scmp.eq.s32.totalorder %s28, 1
      %p203 = por %p201, %p202
      %p204 = scmp.ne.s32.totalorder %s193, %s194
      %p205 = scmp.eq.s32.totalorder %s28, 0
      %p206 = por %p204, %p205
      %p207 = scmp.ne.s32.totalorder %s193, %s194
      %p208 = scmp.eq.s32.totalorder %s29, 1
      %p209 = por %p207, %p208
      %p211 = scmp.ne.s32.totalorder %s194, %s210
      %p212 = scmp.eq.s32.totalorder %s29, 0
      %p213 = por %p211, %p212
      %p214 = scmp.le.s32.totalorder 1, %s23
      %p215 = scmp.lt.s32.totalorder %s23, 3
      %p216 = pnand %p214, %p215
      %p217 = pneg %p216
      // Predicated region
      $region9: #{tpu_custom_call.1} parent=5 // pred_check
        _
      $region10: #{tpu_custom_call.1} parent=5 // pred_check_branch
        %219 = sbr.rel (%p216) target = $region12
      $region11: #{tpu_custom_call.1} parent=5 // pred_region
        %s220 = ssub.s32 %s23, 1
        // Predicated region
        $region13: #{tpu_custom_call.1} parent=11 // pred_check
          %p221 = pneg %p96
        $region14: #{tpu_custom_call.1} parent=11 // pred_check_branch
          %223 = sbr.rel (%p221) target = $region16
        $region15: #{tpu_custom_call.1} parent=11 // pred_region
          %s225 = ssub.s32 2048, 2048
          %226 = vsyncadd [#allocation6], %s225
          %s227 = sshll.u32 [#allocation7], 4
          %s228 = int_to_ptr.vmem [resolvable:$true] %s227
          %233 = dma.hbm_to_vmem [thread:$0]  %s2, 2048, %s228, [#allocation6], 128, 128, 8
        $region16: #{tpu_custom_call.1} parent=11 // pred_fallthru
          _
        // Predicated region
        $region17: #{tpu_custom_call.1} parent=11 // pred_check
          %p234 = pneg %p117
        $region18: #{tpu_custom_call.1} parent=11 // pred_check_branch
          %236 = sbr.rel (%p234) target = $region20
        $region19: #{tpu_custom_call.1} parent=11 // pred_region
          %s238 = ssub.s32 2048, 2048
          %239 = vsyncadd [#allocation9], %s238
          %s240 = sshll.u32 [#allocation8], 4
          %s241 = int_to_ptr.vmem [resolvable:$true] %s240
          %246 = dma.hbm_to_vmem [thread:$0]  %s3, 2048, %s241, [#allocation9], 128, 128, 8
        $region20: #{tpu_custom_call.1} parent=11 // pred_fallthru
          _
        // Predicated region
        $region21: #{tpu_custom_call.1} parent=11 // pred_check
          %p247 = pneg %p138
        $region22: #{tpu_custom_call.1} parent=11 // pred_check_branch
          %249 = sbr.rel (%p247) target = $region24
        $region23: #{tpu_custom_call.1} parent=11 // pred_region
          _
        $region24: #{tpu_custom_call.1} parent=11 // pred_fallthru
          _
        // Predicated region
        $region25: #{tpu_custom_call.1} parent=11 // pred_check
          %p250 = pneg %p159
        $region26: #{tpu_custom_call.1} parent=11 // pred_check_branch
          %252 = sbr.rel (%p250) target = $region28
        $region27: #{tpu_custom_call.1} parent=11 // pred_region
          %s254 = ssub.s32 6144, 6144
          %255 = vsyncadd [#allocation9], %s254
          %s256 = sshll.u32 [#allocation10], 4
          %s257 = int_to_ptr.vmem [resolvable:$true] %s256
          %262 = dma.hbm_to_vmem [thread:$0]  %s5, 6144, %s257, [#allocation9], 64, 64, 4
        $region28: #{tpu_custom_call.1} parent=11 // pred_fallthru
          _
        // Predicated region
        $region29: #{tpu_custom_call.1} parent=11 // pred_check
          %p263 = pneg %p180
        $region30: #{tpu_custom_call.1} parent=11 // pred_check_branch
          %265 = sbr.rel (%p263) target = $region32
        $region31: #{tpu_custom_call.1} parent=11 // pred_region
          _
        $region32: #{tpu_custom_call.1} parent=11 // pred_fallthru
          _
      $region12: #{tpu_custom_call.1} parent=5 // pred_fallthru
        _
      %p266 = scmp.lt.s32.totalorder %s23, 2
      // Predicated region
      $region33: #{tpu_custom_call.1} parent=5 // pred_check
        %p267 = pneg %p266
      $region34: #{tpu_custom_call.1} parent=5 // pred_check_branch
        %269 = sbr.rel (%p267) target = $region36
      $region35: #{tpu_custom_call.1} parent=5 // pred_region
        // Predicated region
        $region37: #{tpu_custom_call.1} parent=35 // pred_check
          %p270 = pneg %p43
        $region38: #{tpu_custom_call.1} parent=35 // pred_check_branch
          %272 = sbr.rel (%p270) target = $region40
        $region39: #{tpu_custom_call.1} parent=35 // pred_region
          %s273 = sand.u32 %s33, 1
          %s274 = scalar_lea.sflag [#allocation3], %s273
          %s275 = sand.u32 %s33, 1
          %s276 = smul.addr %s275, 4
          %s277 = scalar_lea.vmem [#allocation2], %s276
          %s279 = ssub.s32 64, 64
          %280 = vsyncadd %s274, %s279
          %s281 = smul.addr %s23, 64
          %s282 = scalar_lea.hbm %s0, %s281
          %s284 = sshll.u32 %s277, 4
          %s285 = int_to_ptr.vmem [resolvable:$true] %s284
          %287 = dma.hbm_to_vmem [thread:$0]  %s282, 64, %s285, %s274
        $region40: #{tpu_custom_call.1} parent=35 // pred_fallthru
          _
        // Predicated region
        $region41: #{tpu_custom_call.1} parent=35 // pred_check
          %p288 = pneg %p69
        $region42: #{tpu_custom_call.1} parent=35 // pred_check_branch
          %290 = sbr.rel (%p288) target = $region44
        $region43: #{tpu_custom_call.1} parent=35 // pred_region
          %s291 = sand.u32 %s23, 1
          %s292 = scalar_lea.sflag [#allocation6], %s291
          %s293 = sand.u32 %s59, 1
          %s294 = smul.addr %s293, 8
          %s295 = scalar_lea.vmem [#allocation5], %s294
          %s297 = ssub.s32 128, 128
          %298 = vsyncadd %s292, %s297
          %s299 = smul.addr %s23, 128
          %s300 = scalar_lea.hbm %s1, %s299
          %s302 = sshll.u32 %s295, 4
          %s303 = int_to_ptr.vmem [resolvable:$true] %s302
          %305 = dma.hbm_to_vmem [thread:$0]  %s300, 128, %s303, %s292
        $region44: #{tpu_custom_call.1} parent=35 // pred_fallthru
          _
      $region36: #{tpu_custom_call.1} parent=5 // pred_fallthru
        _
      %p306 = scmp.le.s32.totalorder 1, %s23
      %p307 = scmp.lt.s32.totalorder %s23, 3
      %p308 = pnand %p306, %p307
      %p309 = pneg %p308
      // Predicated region
      $region45: #{tpu_custom_call.1} parent=5 // pred_check
        _
      $region46: #{tpu_custom_call.1} parent=5 // pred_check_branch
        %311 = sbr.rel (%p308) target = $region48
      $region47: #{tpu_custom_call.1} parent=5 // pred_region
        %s312 = ssub.s32 %s23, 1
        %s313 = sand.u32 %s36, 1
        %s314 = scalar_lea.sflag [#allocation3], %s313
        %s315 = sand.u32 %s36, 1
        %s316 = smul.addr %s315, 4
        %s317 = scalar_lea.vmem [#allocation2], %s316
        // Predicated region
        $region49: #{tpu_custom_call.1} parent=47 // pred_check
          %p318 = pneg %p49
        $region50: #{tpu_custom_call.1} parent=47 // pred_check_branch
          %320 = sbr.rel (%p318) target = $region52
        $region51: #{tpu_custom_call.1} parent=47 // pred_region
          %321 = dma.done %s314, 64
        $region52: #{tpu_custom_call.1} parent=47 // pred_fallthru
          _
        %s322 = sand.u32 %s28, 1
        %s323 = scalar_lea.sflag [#allocation6], %s322
        %s324 = sand.u32 %s62, 1
        %s325 = smul.addr %s324, 8
        %s326 = scalar_lea.vmem [#allocation5], %s325
        // Predicated region
        $region53: #{tpu_custom_call.1} parent=47 // pred_check
          %p327 = pneg %p75
        $region54: #{tpu_custom_call.1} parent=47 // pred_check_branch
          %329 = sbr.rel (%p327) target = $region56
        $region55: #{tpu_custom_call.1} parent=47 // pred_region
          %330 = dma.done %s323, 128
        $region56: #{tpu_custom_call.1} parent=47 // pred_fallthru
          _
        // Predicated region
        $region57: #{tpu_custom_call.1} parent=47 // pred_check
          %p331 = pneg %p96
        $region58: #{tpu_custom_call.1} parent=47 // pred_check_branch
          %333 = sbr.rel (%p331) target = $region60
        $region59: #{tpu_custom_call.1} parent=47 // pred_region
          %334 = dma.done [#allocation6], 2048
        $region60: #{tpu_custom_call.1} parent=47 // pred_fallthru
          _
        // Predicated region
        $region61: #{tpu_custom_call.1} parent=47 // pred_check
          %p335 = pneg %p117
        $region62: #{tpu_custom_call.1} parent=47 // pred_check_branch
          %337 = sbr.rel (%p335) target = $region64
        $region63: #{tpu_custom_call.1} parent=47 // pred_region
          %338 = dma.done [#allocation9], 2048
        $region64: #{tpu_custom_call.1} parent=47 // pred_fallthru
          _
        // Predicated region
        $region65: #{tpu_custom_call.1} parent=47 // pred_check
          %p339 = pneg %p159
        $region66: #{tpu_custom_call.1} parent=47 // pred_check_branch
          %341 = sbr.rel (%p339) target = $region68
        $region67: #{tpu_custom_call.1} parent=47 // pred_region
          %342 = dma.done [#allocation9], 6144
        $region68: #{tpu_custom_call.1} parent=47 // pred_fallthru
          _
        %s343 = sand.u32 %s36, 1
        %s344 = scalar_lea.sflag [#allocation3], %s343
        %s345 = sand.u32 %s36, 1
        %s346 = smul.addr %s345, 4
        %s347 = scalar_lea.vmem [#allocation2], %s346
        %p348 = pneg %p49
        %p349 = pneg %p46
        %s350 = sand.u32 %s28, 1
        %s351 = scalar_lea.sflag [#allocation6], %s350
        %s352 = sand.u32 %s62, 1
        %s353 = smul.addr %s352, 8
        %s354 = scalar_lea.vmem [#allocation5], %s353
        %p355 = pneg %p75
        %p356 = pneg %p72
        %p357 = pneg %p96
        %p358 = pneg %p93
        %p359 = pneg %p117
        %p360 = pneg %p114
        %p361 = pneg %p138
        %p362 = pneg %p135
        %p363 = pneg %p159
        %p364 = pneg %p156
        %p365 = pneg %p180
        %p366 = pneg %p177
        %p367 = pneg %p206
        %p368 = pneg %p203
        %s369 = sand.u32 %s193, 1
        %s370 = scalar_lea.sflag [#allocation4], %s369
        %s371 = sand.u32 %s193, 1
        %s372 = smul.addr %s371, 8
        %s373 = scalar_lea.vmem [#allocation11], %s372
        %v375 = vld [vmem:[%s317] sm:$0xf]
        %v376 = vld [vmem:[#allocation10] sm:$0xf]
        %v377 = vld [vmem:[#allocation10 + $0x4] sm:$0xf]
        %v378 = vld [vmem:[#allocation10 + $0x8] sm:$0xf]
        %v379 = vld [vmem:[#allocation10 + $0xc] sm:$0xf]
        %v380 = vld [vmem:[#allocation10 + $0x10] sm:$0xf]
        %v381 = vld [vmem:[#allocation10 + $0x14] sm:$0xf]
        %v382 = vld [vmem:[#allocation10 + $0x18] sm:$0xf]
        %v383 = vld [vmem:[#allocation10 + $0x1c] sm:$0xf]
        %v384 = vld [vmem:[#allocation10 + $0x20] sm:$0xf]
        %v385 = vld [vmem:[#allocation10 + $0x24] sm:$0xf]
        %v386 = vld [vmem:[#allocation10 + $0x28] sm:$0xf]
        %v387 = vld [vmem:[#allocation10 + $0x2c] sm:$0xf]
        %v388 = vld [vmem:[#allocation10 + $0x30] sm:$0xf]
        %v389 = vld [vmem:[#allocation10 + $0x34] sm:$0xf]
        %v390 = vld [vmem:[#allocation10 + $0x38] sm:$0xf]
        %v391 = vld [vmem:[#allocation10 + $0x3c] sm:$0xf]
        %v392 = vld [vmem:[%s6] sm:$0x1]
        %v394 = vlaneseq
        %v395 = vshrl.u32 %v394, 7
        %v396 = vsub.s32 0, %v395
        %v397 = vrot.slane %v392, %v396
        %v415 = vunpack.c.l.b16 %v376
        %v416 = vunpack.c.l.b16 %v377
        %v417 = vunpack.c.l.b16 %v378
        %v418 = vunpack.c.l.b16 %v379
        %v419 = vunpack.c.l.b16 %v380
        %v420 = vunpack.c.l.b16 %v381
        %v421 = vunpack.c.l.b16 %v382
        %v422 = vunpack.c.l.b16 %v383
        %v423 = vunpack.c.l.b16 %v384
        %v424 = vunpack.c.l.b16 %v385
        %v425 = vunpack.c.l.b16 %v386
        %v426 = vunpack.c.l.b16 %v387
        %v427 = vunpack.c.l.b16 %v388
        %v428 = vunpack.c.l.b16 %v389
        %v429 = vunpack.c.l.b16 %v390
        %v430 = vunpack.c.l.b16 %v391
        %v431 = vpack.c.b16 %v416, %v415
        %v432 = vpack.c.b16 %v418, %v417
        %v433 = vpack.c.b16 %v420, %v419
        %v434 = vpack.c.b16 %v422, %v421
        %v435 = vpack.c.b16 %v424, %v423
        %v436 = vpack.c.b16 %v426, %v425
        %v437 = vpack.c.b16 %v428, %v427
        %v438 = vpack.c.b16 %v430, %v429
        %447 = vmatprep.subr.bf16.mxu0 0
        %448 = vmatpush1.bf16.msra.mxu0 %v431
        %449 = vmatprep.subr.bf16.mxu0 0
        %450 = vmatpush1.bf16.msra.mxu0 %v432
        %451 = vmatprep.subr.bf16.mxu0 0
        %452 = vmatpush1.bf16.msra.mxu0 %v433
        %453 = vmatprep.subr.bf16.mxu0 0
        %454 = vmatpush1.bf16.msra.mxu0 %v434
        %455 = vmatprep.subr.bf16.mxu0 0
        %456 = vmatpush1.bf16.msra.mxu0 %v435
        %457 = vmatprep.subr.bf16.mxu0 0
        %458 = vmatpush1.bf16.msra.mxu0 %v436
        %459 = vmatprep.subr.bf16.mxu0 0
        %460 = vmatpush1.bf16.msra.mxu0 %v437
        %461 = vmatprep.subr.bf16.mxu0 0
        %462 = vmatpush1.bf16.msra.mxu0 %v438
        %463 = vmatprep.subr.bf16.mxu0 0
        %464 = vmatpush1.bf16.msra.mxu0 0
        %465 = vmatprep.subr.bf16.mxu0 0
        %466 = vmatpush1.bf16.msra.mxu0 0
        %467 = vmatprep.subr.bf16.mxu0 0
        %468 = vmatpush1.bf16.msra.mxu0 0
        %469 = vmatprep.subr.bf16.mxu0 0
        %470 = vmatpush1.bf16.msra.mxu0 0
        %471 = vmatprep.subr.bf16.mxu0 0
        %472 = vmatpush1.bf16.msra.mxu0 0
        %473 = vmatprep.subr.bf16.mxu0 0
        %474 = vmatpush1.bf16.msra.mxu0 0
        %475 = vmatprep.subr.bf16.mxu0 0
        %476 = vmatpush1.bf16.msra.mxu0 0
        %477 = vmatprep.subr.bf16.mxu0 0
        %478 = vmatpush1.bf16.msra.mxu0 0
        %479 = vmatprep.mubr.bf16.mxu0 0
        %480 = vmatmul.mubr.bf16.gmra.mrb[0].mxu0 %v375
        %v481 = vpop.f32.mrb[0].mxu0
        %v482 = vadd.f32 %v397, %v481
        %v483 = vpop.f32.mrb[0].mxu0
        %v484 = vpop.f32.mrb[0].mxu0
        %v485 = vpop.f32.mrb[0].mxu0
        %486 = vdwg.mxu0
        %v487 = vmax.f32 %v482, 0.0
        %v488 = vpack.c.bf16 %v487, %v487
        %s489 = scalar_lea.vmem [#allocation10], 64
        %v490 = vld [vmem:[%s489] sm:$0xf]
        %v491 = vld [vmem:[%s489 + $0x4] sm:$0xf]
        %v492 = vld [vmem:[%s489 + $0x8] sm:$0xf]
        %v493 = vld [vmem:[%s489 + $0xc] sm:$0xf]
        %v494 = vld [vmem:[%s489 + $0x10] sm:$0xf]
        %v495 = vld [vmem:[%s489 + $0x14] sm:$0xf]
        %v496 = vld [vmem:[%s489 + $0x18] sm:$0xf]
        %v497 = vld [vmem:[%s489 + $0x1c] sm:$0xf]
        %v498 = vld [vmem:[%s489 + $0x20] sm:$0xf]
        %v499 = vld [vmem:[%s489 + $0x24] sm:$0xf]
        %v500 = vld [vmem:[%s489 + $0x28] sm:$0xf]
        %v501 = vld [vmem:[%s489 + $0x2c] sm:$0xf]
        %v502 = vld [vmem:[%s489 + $0x30] sm:$0xf]
        %v503 = vld [vmem:[%s489 + $0x34] sm:$0xf]
        %v504 = vld [vmem:[%s489 + $0x38] sm:$0xf]
        %v505 = vld [vmem:[%s489 + $0x3c] sm:$0xf]
        %s506 = scalar_lea.vmem %s6, 1
        %v507 = vld [vmem:[%s506] sm:$0x1]
        %v509 = vlaneseq
        %v510 = vshrl.u32 %v509, 7
        %v511 = vsub.s32 0, %v510
        %v512 = vrot.slane %v507, %v511
        %v530 = vunpack.c.l.b16 %v490
        %v531 = vunpack.c.l.b16 %v491
        %v532 = vunpack.c.l.b16 %v492
        %v533 = vunpack.c.l.b16 %v493
        %v534 = vunpack.c.l.b16 %v494
        %v535 = vunpack.c.l.b16 %v495
        %v536 = vunpack.c.l.b16 %v496
        %v537 = vunpack.c.l.b16 %v497
        %v538 = vunpack.c.l.b16 %v498
        %v539 = vunpack.c.l.b16 %v499
        %v540 = vunpack.c.l.b16 %v500
        %v541 = vunpack.c.l.b16 %v501
        %v542 = vunpack.c.l.b16 %v502
        %v543 = vunpack.c.l.b16 %v503
        %v544 = vunpack.c.l.b16 %v504
        %v545 = vunpack.c.l.b16 %v505
        %v546 = vpack.c.b16 %v531, %v530
        %v547 = vpack.c.b16 %v533, %v532
        %v548 = vpack.c.b16 %v535, %v534
        %v549 = vpack.c.b16 %v537, %v536
        %v550 = vpack.c.b16 %v539, %v538
        %v551 = vpack.c.b16 %v541, %v540
        %v552 = vpack.c.b16 %v543, %v542
        %v553 = vpack.c.b16 %v545, %v544
        %562 = vmatprep.subr.bf16.mxu0 0
        %563 = vmatpush1.bf16.msra.mxu0 %v546
        %564 = vmatprep.subr.bf16.mxu0 0
        %565 = vmatpush1.bf16.msra.mxu0 %v547
        %566 = vmatprep.subr.bf16.mxu0 0
        %567 = vmatpush1.bf16.msra.mxu0 %v548
        %568 = vmatprep.subr.bf16.mxu0 0
        %569 = vmatpush1.bf16.msra.mxu0 %v549
        %570 = vmatprep.subr.bf16.mxu0 0
        %571 = vmatpush1.bf16.msra.mxu0 %v550
        %572 = vmatprep.subr.bf16.mxu0 0
        %573 = vmatpush1.bf16.msra.mxu0 %v551
        %574 = vmatprep.subr.bf16.mxu0 0
        %575 = vmatpush1.bf16.msra.mxu0 %v552
        %576 = vmatprep.subr.bf16.mxu0 0
        %577 = vmatpush1.bf16.msra.mxu0 %v553
        %578 = vmatprep.subr.bf16.mxu0 0
        %579 = vmatpush1.bf16.msra.mxu0 0
        %580 = vmatprep.subr.bf16.mxu0 0
        %581 = vmatpush1.bf16.msra.mxu0 0
        %582 = vmatprep.subr.bf16.mxu0 0
        %583 = vmatpush1.bf16.msra.mxu0 0
        %584 = vmatprep.subr.bf16.mxu0 0
        %585 = vmatpush1.bf16.msra.mxu0 0
        %586 = vmatprep.subr.bf16.mxu0 0
        %587 = vmatpush1.bf16.msra.mxu0 0
        %588 = vmatprep.subr.bf16.mxu0 0
        %589 = vmatpush1.bf16.msra.mxu0 0
        %590 = vmatprep.subr.bf16.mxu0 0
        %591 = vmatpush1.bf16.msra.mxu0 0
        %592 = vmatprep.subr.bf16.mxu0 0
        %593 = vmatpush1.bf16.msra.mxu0 0
        %594 = vmatprep.mubr.bf16.mxu0 0
        %595 = vmatmul.mubr.bf16.gmra.mrb[0].mxu0 %v488
        %v596 = vpop.f32.mrb[0].mxu0
        %v597 = vadd.f32 %v512, %v596
        %v598 = vpop.f32.mrb[0].mxu0
        %v599 = vpop.f32.mrb[0].mxu0
        %v600 = vpop.f32.mrb[0].mxu0
        %601 = vdwg.mxu0
        %v602 = vmax.f32 %v597, 0.0
        %v603 = vpack.c.bf16 %v602, %v602
        %s604 = scalar_lea.vmem [#allocation10], 128
        %v605 = vld [vmem:[%s604] sm:$0xf]
        %v606 = vld [vmem:[%s604 + $0x4] sm:$0xf]
        %v607 = vld [vmem:[%s604 + $0x8] sm:$0xf]
        %v608 = vld [vmem:[%s604 + $0xc] sm:$0xf]
        %v609 = vld [vmem:[%s604 + $0x10] sm:$0xf]
        %v610 = vld [vmem:[%s604 + $0x14] sm:$0xf]
        %v611 = vld [vmem:[%s604 + $0x18] sm:$0xf]
        %v612 = vld [vmem:[%s604 + $0x1c] sm:$0xf]
        %v613 = vld [vmem:[%s604 + $0x20] sm:$0xf]
        %v614 = vld [vmem:[%s604 + $0x24] sm:$0xf]
        %v615 = vld [vmem:[%s604 + $0x28] sm:$0xf]
        %v616 = vld [vmem:[%s604 + $0x2c] sm:$0xf]
        %v617 = vld [vmem:[%s604 + $0x30] sm:$0xf]
        %v618 = vld [vmem:[%s604 + $0x34] sm:$0xf]
        %v619 = vld [vmem:[%s604 + $0x38] sm:$0xf]
        %v620 = vld [vmem:[%s604 + $0x3c] sm:$0xf]
        %s621 = scalar_lea.vmem %s6, 2
        %v622 = vld [vmem:[%s621] sm:$0x1]
        %v624 = vlaneseq
        %v625 = vshrl.u32 %v624, 7
        %v626 = vsub.s32 0, %v625
        %v627 = vrot.slane %v622, %v626
        %v645 = vunpack.c.l.b16 %v605
        %v646 = vunpack.c.l.b16 %v606
        %v647 = vunpack.c.l.b16 %v607
        %v648 = vunpack.c.l.b16 %v608
        %v649 = vunpack.c.l.b16 %v609
        %v650 = vunpack.c.l.b16 %v610
        %v651 = vunpack.c.l.b16 %v611
        %v652 = vunpack.c.l.b16 %v612
        %v653 = vunpack.c.l.b16 %v613
        %v654 = vunpack.c.l.b16 %v614
        %v655 = vunpack.c.l.b16 %v615
        %v656 = vunpack.c.l.b16 %v616
        %v657 = vunpack.c.l.b16 %v617
        %v658 = vunpack.c.l.b16 %v618
        %v659 = vunpack.c.l.b16 %v619
        %v660 = vunpack.c.l.b16 %v620
        %v661 = vpack.c.b16 %v646, %v645
        %v662 = vpack.c.b16 %v648, %v647
        %v663 = vpack.c.b16 %v650, %v649
        %v664 = vpack.c.b16 %v652, %v651
        %v665 = vpack.c.b16 %v654, %v653
        %v666 = vpack.c.b16 %v656, %v655
        %v667 = vpack.c.b16 %v658, %v657
        %v668 = vpack.c.b16 %v660, %v659
        %677 = vmatprep.subr.bf16.mxu0 0
        %678 = vmatpush1.bf16.msra.mxu0 %v661
        %679 = vmatprep.subr.bf16.mxu0 0
        %680 = vmatpush1.bf16.msra.mxu0 %v662
        %681 = vmatprep.subr.bf16.mxu0 0
        %682 = vmatpush1.bf16.msra.mxu0 %v663
        %683 = vmatprep.subr.bf16.mxu0 0
        %684 = vmatpush1.bf16.msra.mxu0 %v664
        %685 = vmatprep.subr.bf16.mxu0 0
        %686 = vmatpush1.bf16.msra.mxu0 %v665
        %687 = vmatprep.subr.bf16.mxu0 0
        %688 = vmatpush1.bf16.msra.mxu0 %v666
        %689 = vmatprep.subr.bf16.mxu0 0
        %690 = vmatpush1.bf16.msra.mxu0 %v667
        %691 = vmatprep.subr.bf16.mxu0 0
        %692 = vmatpush1.bf16.msra.mxu0 %v668
        %693 = vmatprep.subr.bf16.mxu0 0
        %694 = vmatpush1.bf16.msra.mxu0 0
        %695 = vmatprep.subr.bf16.mxu0 0
        %696 = vmatpush1.bf16.msra.mxu0 0
        %697 = vmatprep.subr.bf16.mxu0 0
        %698 = vmatpush1.bf16.msra.mxu0 0
        %699 = vmatprep.subr.bf16.mxu0 0
        %700 = vmatpush1.bf16.msra.mxu0 0
        %701 = vmatprep.subr.bf16.mxu0 0
        %702 = vmatpush1.bf16.msra.mxu0 0
        %703 = vmatprep.subr.bf16.mxu0 0
        %704 = vmatpush1.bf16.msra.mxu0 0
        %705 = vmatprep.subr.bf16.mxu0 0
        %706 = vmatpush1.bf16.msra.mxu0 0
        %707 = vmatprep.subr.bf16.mxu0 0
        %708 = vmatpush1.bf16.msra.mxu0 0
        %709 = vmatprep.mubr.bf16.mxu0 0
        %710 = vmatmul.mubr.bf16.gmra.mrb[0].mxu0 %v603
        %v711 = vpop.f32.mrb[0].mxu0
        %v712 = vadd.f32 %v627, %v711
        %v713 = vpop.f32.mrb[0].mxu0
        %v714 = vpop.f32.mrb[0].mxu0
        %v715 = vpop.f32.mrb[0].mxu0
        %716 = vdwg.mxu0
        %717 = vmax.xlane.f32.xlu0 %v712
        %v718 = vpop.xlane.xlu0 %717
        %v719 = vsub.f32 %v712, %v718
        %v720 = vmul.f32 %v719, 1.442695
        %v721 = vpow.pop %v720
        %722 = vadd.xlane.f32.xlu0 %v721
        %v723 = vpop.xlane.xlu0 %722
        %v724 = vlog2.pop %v723
        %v725 = vmul.f32 %v724, 0.6931472
        %v726 = vsub.f32 %v719, %v725
        %v727 = vld [vmem:[#allocation7] sm:$0xff]
        %v728 = vld [vmem:[#allocation7 + $0x8] sm:$0xff]
        %v729 = vld [vmem:[#allocation7 + $0x10] sm:$0xff]
        %v730 = vld [vmem:[#allocation7 + $0x18] sm:$0xff]
        %v731 = vld [vmem:[#allocation7 + $0x20] sm:$0xff]
        %v732 = vld [vmem:[#allocation7 + $0x28] sm:$0xff]
        %v733 = vld [vmem:[#allocation7 + $0x30] sm:$0xff]
        %v734 = vld [vmem:[#allocation7 + $0x38] sm:$0xff]
        %v735 = vld [vmem:[#allocation7 + $0x40] sm:$0xff]
        %v736 = vld [vmem:[#allocation7 + $0x48] sm:$0xff]
        %v737 = vld [vmem:[#allocation7 + $0x50] sm:$0xff]
        %v738 = vld [vmem:[#allocation7 + $0x58] sm:$0xff]
        %v739 = vld [vmem:[#allocation7 + $0x60] sm:$0xff]
        %v740 = vld [vmem:[#allocation7 + $0x68] sm:$0xff]
        %v741 = vld [vmem:[#allocation7 + $0x70] sm:$0xff]
        %v742 = vld [vmem:[#allocation7 + $0x78] sm:$0xff]
        %v743 = vld [vmem:[%s4] sm:$0x1]
        %v745 = vlaneseq
        %v746 = vshrl.u32 %v745, 7
        %v747 = vsub.s32 0, %v746
        %v748 = vrot.slane %v743, %v747
        %750 = vmatprep.subr.mxu0 0.0
        %751 = vmatpush1.msra.mxu0 %v727
        %752 = vmatprep.subr.mxu0 0.0
        %753 = vmatpush1.msra.mxu0 %v728
        %754 = vmatprep.subr.mxu0 0.0
        %755 = vmatpush1.msra.mxu0 %v729
        %756 = vmatprep.subr.mxu0 0.0
        %757 = vmatpush1.msra.mxu0 %v730
        %758 = vmatprep.subr.mxu0 0.0
        %759 = vmatpush1.msra.mxu0 %v731
        %760 = vmatprep.subr.mxu0 0.0
        %761 = vmatpush1.msra.mxu0 %v732
        %762 = vmatprep.subr.mxu0 0.0
        %763 = vmatpush1.msra.mxu0 %v733
        %764 = vmatprep.subr.mxu0 0.0
        %765 = vmatpush1.msra.mxu0 %v734
        %766 = vmatprep.subr.mxu0 0.0
        %767 = vmatpush1.msra.mxu0 %v735
        %768 = vmatprep.subr.mxu0 0.0
        %769 = vmatpush1.msra.mxu0 %v736
        %770 = vmatprep.subr.mxu0 0.0
        %771 = vmatpush1.msra.mxu0 %v737
        %772 = vmatprep.subr.mxu0 0.0
        %773 = vmatpush1.msra.mxu0 %v738
        %774 = vmatprep.subr.mxu0 0.0
        %775 = vmatpush1.msra.mxu0 %v739
        %776 = vmatprep.subr.mxu0 0.0
        %777 = vmatpush1.msra.mxu0 %v740
        %778 = vmatprep.subr.mxu0 0.0
        %779 = vmatpush1.msra.mxu0 %v741
        %780 = vmatprep.subr.mxu0 0.0
        %781 = vmatpush1.msra.mxu0 %v742
        %782 = vmatprep.subr.mxu0 0.0
        %783 = vmatpush1.msra.mxu0 0.0
        %784 = vmatprep.subr.mxu0 0.0
        %785 = vmatpush1.msra.mxu0 0.0
        %786 = vmatprep.subr.mxu0 0.0
        %787 = vmatpush1.msra.mxu0 0.0
        %788 = vmatprep.subr.mxu0 0.0
        %789 = vmatpush1.msra.mxu0 0.0
        %790 = vmatprep.subr.mxu0 0.0
        %791 = vmatpush1.msra.mxu0 0.0
        %792 = vmatprep.subr.mxu0 0.0
        %793 = vmatpush1.msra.mxu0 0.0
        %794 = vmatprep.subr.mxu0 0.0
        %795 = vmatpush1.msra.mxu0 0.0
        %796 = vmatprep.subr.mxu0 0.0
        %797 = vmatpush1.msra.mxu0 0.0
        %798 = vmatprep.subr.mxu0 0.0
        %799 = vmatpush1.msra.mxu0 0.0
        %800 = vmatprep.subr.mxu0 0.0
        %801 = vmatpush1.msra.mxu0 0.0
        %802 = vmatprep.subr.mxu0 0.0
        %803 = vmatpush1.msra.mxu0 0.0
        %804 = vmatprep.subr.mxu0 0.0
        %805 = vmatpush1.msra.mxu0 0.0
        %806 = vmatprep.subr.mxu0 0.0
        %807 = vmatpush1.msra.mxu0 0.0
        %808 = vmatprep.subr.mxu0 0.0
        %809 = vmatpush1.msra.mxu0 0.0
        %810 = vmatprep.subr.mxu0 0.0
        %811 = vmatpush1.msra.mxu0 0.0
        %812 = vmatprep.subr.mxu0 0.0
        %813 = vmatpush1.msra.mxu0 0.0
        %814 = vmatprep.mubr.f32.mxu0 0.0
        %815 = vmatmul.mubr.f32.gmra.mrb[0].mxu0 %v726
        %v816 = vpop.f32.mrb[0].mxu0
        %v817 = vadd.f32 %v748, %v816
        %v818 = vpop.f32.mrb[0].mxu0
        %819 = vdwg.mxu0
        %v820 = vmax.f32 %v817, -15.942385
        %v821 = vmin.f32 %v820, -1.192093e-07
        %v822 = vld [vmem:[%s326] sm:$0xff]
        %v823 = vadd.f32 %v821, %v822
        %824 = vmax.xlane.f32.xlu0 %v823
        %v825 = vpop.xlane.xlu0 %824
        %v826 = vsub.f32 %v823, %v825
        %v827 = vmul.f32 %v826, 1.442695
        %v828 = vpow.pop %v827
        %829 = vadd.xlane.f32.xlu0 %v828
        %v830 = vpop.xlane.xlu0 %829
        %v831 = vrcp.pop %v830
        %v832 = vmul.f32 %v828, %v831
        %v833 = vld [vmem:[#allocation8] sm:$0xff]
        %v834 = vld [vmem:[#allocation8 + $0x8] sm:$0xff]
        %v835 = vld [vmem:[#allocation8 + $0x10] sm:$0xff]
        %v836 = vld [vmem:[#allocation8 + $0x18] sm:$0xff]
        %v837 = vld [vmem:[#allocation8 + $0x20] sm:$0xff]
        %v838 = vld [vmem:[#allocation8 + $0x28] sm:$0xff]
        %v839 = vld [vmem:[#allocation8 + $0x30] sm:$0xff]
        %v840 = vld [vmem:[#allocation8 + $0x38] sm:$0xff]
        %v841 = vld [vmem:[#allocation8 + $0x40] sm:$0xff]
        %v842 = vld [vmem:[#allocation8 + $0x48] sm:$0xff]
        %v843 = vld [vmem:[#allocation8 + $0x50] sm:$0xff]
        %v844 = vld [vmem:[#allocation8 + $0x58] sm:$0xff]
        %v845 = vld [vmem:[#allocation8 + $0x60] sm:$0xff]
        %v846 = vld [vmem:[#allocation8 + $0x68] sm:$0xff]
        %v847 = vld [vmem:[#allocation8 + $0x70] sm:$0xff]
        %v848 = vld [vmem:[#allocation8 + $0x78] sm:$0xff]
        %849 = vmatprep.subr.mxu0 0.0
        %850 = vmatpush1.msra.mxu0 %v833
        %851 = vmatprep.subr.mxu0 0.0
        %852 = vmatpush1.msra.mxu0 %v834
        %853 = vmatprep.subr.mxu0 0.0
        %854 = vmatpush1.msra.mxu0 %v835
        %855 = vmatprep.subr.mxu0 0.0
        %856 = vmatpush1.msra.mxu0 %v836
        %857 = vmatprep.subr.mxu0 0.0
        %858 = vmatpush1.msra.mxu0 %v837
        %859 = vmatprep.subr.mxu0 0.0
        %860 = vmatpush1.msra.mxu0 %v838
        %861 = vmatprep.subr.mxu0 0.0
        %862 = vmatpush1.msra.mxu0 %v839
        %863 = vmatprep.subr.mxu0 0.0
        %864 = vmatpush1.msra.mxu0 %v840
        %865 = vmatprep.subr.mxu0 0.0
        %866 = vmatpush1.msra.mxu0 %v841
        %867 = vmatprep.subr.mxu0 0.0
        %868 = vmatpush1.msra.mxu0 %v842
        %869 = vmatprep.subr.mxu0 0.0
        %870 = vmatpush1.msra.mxu0 %v843
        %871 = vmatprep.subr.mxu0 0.0
        %872 = vmatpush1.msra.mxu0 %v844
        %873 = vmatprep.subr.mxu0 0.0
        %874 = vmatpush1.msra.mxu0 %v845
        %875 = vmatprep.subr.mxu0 0.0
        %876 = vmatpush1.msra.mxu0 %v846
        %877 = vmatprep.subr.mxu0 0.0
        %878 = vmatpush1.msra.mxu0 %v847
        %879 = vmatprep.subr.mxu0 0.0
        %880 = vmatpush1.msra.mxu0 %v848
        %881 = vmatprep.subr.mxu0 0.0
        %882 = vmatpush1.msra.mxu0 0.0
        %883 = vmatprep.subr.mxu0 0.0
        %884 = vmatpush1.msra.mxu0 0.0
        %885 = vmatprep.subr.mxu0 0.0
        %886 = vmatpush1.msra.mxu0 0.0
        %887 = vmatprep.subr.mxu0 0.0
        %888 = vmatpush1.msra.mxu0 0.0
        %889 = vmatprep.subr.mxu0 0.0
        %890 = vmatpush1.msra.mxu0 0.0
        %891 = vmatprep.subr.mxu0 0.0
        %892 = vmatpush1.msra.mxu0 0.0
        %893 = vmatprep.subr.mxu0 0.0
        %894 = vmatpush1.msra.mxu0 0.0
        %895 = vmatprep.subr.mxu0 0.0
        %896 = vmatpush1.msra.mxu0 0.0
        %897 = vmatprep.subr.mxu0 0.0
        %898 = vmatpush1.msra.mxu0 0.0
        %899 = vmatprep.subr.mxu0 0.0
        %900 = vmatpush1.msra.mxu0 0.0
        %901 = vmatprep.subr.mxu0 0.0
        %902 = vmatpush1.msra.mxu0 0.0
        %903 = vmatprep.subr.mxu0 0.0
        %904 = vmatpush1.msra.mxu0 0.0
        %905 = vmatprep.subr.mxu0 0.0
        %906 = vmatpush1.msra.mxu0 0.0
        %907 = vmatprep.subr.mxu0 0.0
        %908 = vmatpush1.msra.mxu0 0.0
        %909 = vmatprep.subr.mxu0 0.0
        %910 = vmatpush1.msra.mxu0 0.0
        %911 = vmatprep.subr.mxu0 0.0
        %912 = vmatpush1.msra.mxu0 0.0
        %913 = vmatprep.mubr.f32.mxu0 0.0
        %914 = vmatmul.mubr.f32.gmra.mrb[0].mxu0 %v832
        %v915 = vpop.f32.mrb[0].mxu0
        %v916 = vadd.f32 0.0, %v915
        %v917 = vpop.f32.mrb[0].mxu0
        %918 = vdwg.mxu0
        %v919 = vpack.c.bf16 %v916, %v916
        %s920 = scalar_lea.vmem [#allocation10], 192
        %v921 = vld [vmem:[%s920] sm:$0xf]
        %v922 = vld [vmem:[%s920 + $0x4] sm:$0xf]
        %v923 = vld [vmem:[%s920 + $0x8] sm:$0xf]
        %v924 = vld [vmem:[%s920 + $0xc] sm:$0xf]
        %v925 = vld [vmem:[%s920 + $0x10] sm:$0xf]
        %v926 = vld [vmem:[%s920 + $0x14] sm:$0xf]
        %v927 = vld [vmem:[%s920 + $0x18] sm:$0xf]
        %v928 = vld [vmem:[%s920 + $0x1c] sm:$0xf]
        %v929 = vld [vmem:[%s920 + $0x20] sm:$0xf]
        %v930 = vld [vmem:[%s920 + $0x24] sm:$0xf]
        %v931 = vld [vmem:[%s920 + $0x28] sm:$0xf]
        %v932 = vld [vmem:[%s920 + $0x2c] sm:$0xf]
        %v933 = vld [vmem:[%s920 + $0x30] sm:$0xf]
        %v934 = vld [vmem:[%s920 + $0x34] sm:$0xf]
        %v935 = vld [vmem:[%s920 + $0x38] sm:$0xf]
        %v936 = vld [vmem:[%s920 + $0x3c] sm:$0xf]
        %s937 = scalar_lea.vmem %s6, 3
        %v938 = vld [vmem:[%s937] sm:$0x1]
        %v940 = vlaneseq
        %v941 = vshrl.u32 %v940, 7
        %v942 = vsub.s32 0, %v941
        %v943 = vrot.slane %v938, %v942
        %v961 = vunpack.c.l.b16 %v921
        %v962 = vunpack.c.l.b16 %v922
        %v963 = vunpack.c.l.b16 %v923
        %v964 = vunpack.c.l.b16 %v924
        %v965 = vunpack.c.l.b16 %v925
        %v966 = vunpack.c.l.b16 %v926
        %v967 = vunpack.c.l.b16 %v927
        %v968 = vunpack.c.l.b16 %v928
        %v969 = vunpack.c.l.b16 %v929
        %v970 = vunpack.c.l.b16 %v930
        %v971 = vunpack.c.l.b16 %v931
        %v972 = vunpack.c.l.b16 %v932
        %v973 = vunpack.c.l.b16 %v933
        %v974 = vunpack.c.l.b16 %v934
        %v975 = vunpack.c.l.b16 %v935
        %v976 = vunpack.c.l.b16 %v936
        %v977 = vpack.c.b16 %v962, %v961
        %v978 = vpack.c.b16 %v964, %v963
        %v979 = vpack.c.b16 %v966, %v965
        %v980 = vpack.c.b16 %v968, %v967
        %v981 = vpack.c.b16 %v970, %v969
        %v982 = vpack.c.b16 %v972, %v971
        %v983 = vpack.c.b16 %v974, %v973
        %v984 = vpack.c.b16 %v976, %v975
        %993 = vmatprep.subr.bf16.mxu0 0
        %994 = vmatpush1.bf16.msra.mxu0 %v977
        %995 = vmatprep.subr.bf16.mxu0 0
        %996 = vmatpush1.bf16.msra.mxu0 %v978
        %997 = vmatprep.subr.bf16.mxu0 0
        %998 = vmatpush1.bf16.msra.mxu0 %v979
        %999 = vmatprep.subr.bf16.mxu0 0
        %1000 = vmatpush1.bf16.msra.mxu0 %v980
        %1001 = vmatprep.subr.bf16.mxu0 0
        %1002 = vmatpush1.bf16.msra.mxu0 %v981
        %1003 = vmatprep.subr.bf16.mxu0 0
        %1004 = vmatpush1.bf16.msra.mxu0 %v982
        %1005 = vmatprep.subr.bf16.mxu0 0
        %1006 = vmatpush1.bf16.msra.mxu0 %v983
        %1007 = vmatprep.subr.bf16.mxu0 0
        %1008 = vmatpush1.bf16.msra.mxu0 %v984
        %1009 = vmatprep.subr.bf16.mxu0 0
        %1010 = vmatpush1.bf16.msra.mxu0 0
        %1011 = vmatprep.subr.bf16.mxu0 0
        %1012 = vmatpush1.bf16.msra.mxu0 0
        %1013 = vmatprep.subr.bf16.mxu0 0
        %1014 = vmatpush1.bf16.msra.mxu0 0
        %1015 = vmatprep.subr.bf16.mxu0 0
        %1016 = vmatpush1.bf16.msra.mxu0 0
        %1017 = vmatprep.subr.bf16.mxu0 0
        %1018 = vmatpush1.bf16.msra.mxu0 0
        %1019 = vmatprep.subr.bf16.mxu0 0
        %1020 = vmatpush1.bf16.msra.mxu0 0
        %1021 = vmatprep.subr.bf16.mxu0 0
        %1022 = vmatpush1.bf16.msra.mxu0 0
        %1023 = vmatprep.subr.bf16.mxu0 0
        %1024 = vmatpush1.bf16.msra.mxu0 0
        %1025 = vmatprep.mubr.bf16.mxu0 0
        %1026 = vmatmul.mubr.bf16.gmra.mrb[0].mxu0 %v919
        %v1027 = vpop.f32.mrb[0].mxu0
        %v1028 = vadd.f32 %v943, %v1027
        %v1029 = vpop.f32.mrb[0].mxu0
        %v1030 = vpop.f32.mrb[0].mxu0
        %v1031 = vpop.f32.mrb[0].mxu0
        %1032 = vdwg.mxu0
        %v1033 = vmax.f32 %v1028, 0.0
        %v1034 = vpack.c.bf16 %v1033, %v1033
        %s1035 = scalar_lea.vmem [#allocation10], 256
        %v1036 = vld [vmem:[%s1035] sm:$0xf]
        %v1037 = vld [vmem:[%s1035 + $0x4] sm:$0xf]
        %v1038 = vld [vmem:[%s1035 + $0x8] sm:$0xf]
        %v1039 = vld [vmem:[%s1035 + $0xc] sm:$0xf]
        %v1040 = vld [vmem:[%s1035 + $0x10] sm:$0xf]
        %v1041 = vld [vmem:[%s1035 + $0x14] sm:$0xf]
        %v1042 = vld [vmem:[%s1035 + $0x18] sm:$0xf]
        %v1043 = vld [vmem:[%s1035 + $0x1c] sm:$0xf]
        %v1044 = vld [vmem:[%s1035 + $0x20] sm:$0xf]
        %v1045 = vld [vmem:[%s1035 + $0x24] sm:$0xf]
        %v1046 = vld [vmem:[%s1035 + $0x28] sm:$0xf]
        %v1047 = vld [vmem:[%s1035 + $0x2c] sm:$0xf]
        %v1048 = vld [vmem:[%s1035 + $0x30] sm:$0xf]
        %v1049 = vld [vmem:[%s1035 + $0x34] sm:$0xf]
        %v1050 = vld [vmem:[%s1035 + $0x38] sm:$0xf]
        %v1051 = vld [vmem:[%s1035 + $0x3c] sm:$0xf]
        %s1052 = scalar_lea.vmem %s6, 4
        %v1053 = vld [vmem:[%s1052] sm:$0x1]
        %v1055 = vlaneseq
        %v1056 = vshrl.u32 %v1055, 7
        %v1057 = vsub.s32 0, %v1056
        %v1058 = vrot.slane %v1053, %v1057
        %v1076 = vunpack.c.l.b16 %v1036
        %v1077 = vunpack.c.l.b16 %v1037
        %v1078 = vunpack.c.l.b16 %v1038
        %v1079 = vunpack.c.l.b16 %v1039
        %v1080 = vunpack.c.l.b16 %v1040
        %v1081 = vunpack.c.l.b16 %v1041
        %v1082 = vunpack.c.l.b16 %v1042
        %v1083 = vunpack.c.l.b16 %v1043
        %v1084 = vunpack.c.l.b16 %v1044
        %v1085 = vunpack.c.l.b16 %v1045
        %v1086 = vunpack.c.l.b16 %v1046
        %v1087 = vunpack.c.l.b16 %v1047
        %v1088 = vunpack.c.l.b16 %v1048
        %v1089 = vunpack.c.l.b16 %v1049
        %v1090 = vunpack.c.l.b16 %v1050
        %v1091 = vunpack.c.l.b16 %v1051
        %v1092 = vpack.c.b16 %v1077, %v1076
        %v1093 = vpack.c.b16 %v1079, %v1078
        %v1094 = vpack.c.b16 %v1081, %v1080
        %v1095 = vpack.c.b16 %v1083, %v1082
        %v1096 = vpack.c.b16 %v1085, %v1084
        %v1097 = vpack.c.b16 %v1087, %v1086
        %v1098 = vpack.c.b16 %v1089, %v1088
        %v1099 = vpack.c.b16 %v1091, %v1090
        %1108 = vmatprep.subr.bf16.mxu0 0
        %1109 = vmatpush1.bf16.msra.mxu0 %v1092
        %1110 = vmatprep.subr.bf16.mxu0 0
        %1111 = vmatpush1.bf16.msra.mxu0 %v1093
        %1112 = vmatprep.subr.bf16.mxu0 0
        %1113 = vmatpush1.bf16.msra.mxu0 %v1094
        %1114 = vmatprep.subr.bf16.mxu0 0
        %1115 = vmatpush1.bf16.msra.mxu0 %v1095
        %1116 = vmatprep.subr.bf16.mxu0 0
        %1117 = vmatpush1.bf16.msra.mxu0 %v1096
        %1118 = vmatprep.subr.bf16.mxu0 0
        %1119 = vmatpush1.bf16.msra.mxu0 %v1097
        %1120 = vmatprep.subr.bf16.mxu0 0
        %1121 = vmatpush1.bf16.msra.mxu0 %v1098
        %1122 = vmatprep.subr.bf16.mxu0 0
        %1123 = vmatpush1.bf16.msra.mxu0 %v1099
        %1124 = vmatprep.subr.bf16.mxu0 0
        %1125 = vmatpush1.bf16.msra.mxu0 0
        %1126 = vmatprep.subr.bf16.mxu0 0
        %1127 = vmatpush1.bf16.msra.mxu0 0
        %1128 = vmatprep.subr.bf16.mxu0 0
        %1129 = vmatpush1.bf16.msra.mxu0 0
        %1130 = vmatprep.subr.bf16.mxu0 0
        %1131 = vmatpush1.bf16.msra.mxu0 0
        %1132 = vmatprep.subr.bf16.mxu0 0
        %1133 = vmatpush1.bf16.msra.mxu0 0
        %1134 = vmatprep.subr.bf16.mxu0 0
        %1135 = vmatpush1.bf16.msra.mxu0 0
        %1136 = vmatprep.subr.bf16.mxu0 0
        %1137 = vmatpush1.bf16.msra.mxu0 0
        %1138 = vmatprep.subr.bf16.mxu0 0
        %1139 = vmatpush1.bf16.msra.mxu0 0
        %1140 = vmatprep.mubr.bf16.mxu0 0
        %1141 = vmatmul.mubr.bf16.gmra.mrb[0].mxu0 %v1034
        %v1142 = vpop.f32.mrb[0].mxu0
        %v1143 = vadd.f32 %v1058, %v1142
        %v1144 = vpop.f32.mrb[0].mxu0
        %v1145 = vpop.f32.mrb[0].mxu0
        %v1146 = vpop.f32.mrb[0].mxu0
        %1147 = vdwg.mxu0
        %v1148 = vmax.f32 %v1143, 0.0
        %v1149 = vpack.c.bf16 %v1148, %v1148
        %s1150 = scalar_lea.vmem [#allocation10], 320
        %v1151 = vld [vmem:[%s1150] sm:$0xf]
        %v1152 = vld [vmem:[%s1150 + $0x4] sm:$0xf]
        %v1153 = vld [vmem:[%s1150 + $0x8] sm:$0xf]
        %v1154 = vld [vmem:[%s1150 + $0xc] sm:$0xf]
        %v1155 = vld [vmem:[%s1150 + $0x10] sm:$0xf]
        %v1156 = vld [vmem:[%s1150 + $0x14] sm:$0xf]
        %v1157 = vld [vmem:[%s1150 + $0x18] sm:$0xf]
        %v1158 = vld [vmem:[%s1150 + $0x1c] sm:$0xf]
        %v1159 = vld [vmem:[%s1150 + $0x20] sm:$0xf]
        %v1160 = vld [vmem:[%s1150 + $0x24] sm:$0xf]
        %v1161 = vld [vmem:[%s1150 + $0x28] sm:$0xf]
        %v1162 = vld [vmem:[%s1150 + $0x2c] sm:$0xf]
        %v1163 = vld [vmem:[%s1150 + $0x30] sm:$0xf]
        %v1164 = vld [vmem:[%s1150 + $0x34] sm:$0xf]
        %v1165 = vld [vmem:[%s1150 + $0x38] sm:$0xf]
        %v1166 = vld [vmem:[%s1150 + $0x3c] sm:$0xf]
        %s1167 = scalar_lea.vmem %s6, 5
        %v1168 = vld [vmem:[%s1167] sm:$0x1]
        %v1170 = vlaneseq
        %v1171 = vshrl.u32 %v1170, 7
        %v1172 = vsub.s32 0, %v1171
        %v1173 = vrot.slane %v1168, %v1172
        %v1191 = vunpack.c.l.b16 %v1151
        %v1192 = vunpack.c.l.b16 %v1152
        %v1193 = vunpack.c.l.b16 %v1153
        %v1194 = vunpack.c.l.b16 %v1154
        %v1195 = vunpack.c.l.b16 %v1155
        %v1196 = vunpack.c.l.b16 %v1156
        %v1197 = vunpack.c.l.b16 %v1157
        %v1198 = vunpack.c.l.b16 %v1158
        %v1199 = vunpack.c.l.b16 %v1159
        %v1200 = vunpack.c.l.b16 %v1160
        %v1201 = vunpack.c.l.b16 %v1161
        %v1202 = vunpack.c.l.b16 %v1162
        %v1203 = vunpack.c.l.b16 %v1163
        %v1204 = vunpack.c.l.b16 %v1164
        %v1205 = vunpack.c.l.b16 %v1165
        %v1206 = vunpack.c.l.b16 %v1166
        %v1207 = vpack.c.b16 %v1192, %v1191
        %v1208 = vpack.c.b16 %v1194, %v1193
        %v1209 = vpack.c.b16 %v1196, %v1195
        %v1210 = vpack.c.b16 %v1198, %v1197
        %v1211 = vpack.c.b16 %v1200, %v1199
        %v1212 = vpack.c.b16 %v1202, %v1201
        %v1213 = vpack.c.b16 %v1204, %v1203
        %v1214 = vpack.c.b16 %v1206, %v1205
        %1223 = vmatprep.subr.bf16.mxu0 0
        %1224 = vmatpush1.bf16.msra.mxu0 %v1207
        %1225 = vmatprep.subr.bf16.mxu0 0
        %1226 = vmatpush1.bf16.msra.mxu0 %v1208
        %1227 = vmatprep.subr.bf16.mxu0 0
        %1228 = vmatpush1.bf16.msra.mxu0 %v1209
        %1229 = vmatprep.subr.bf16.mxu0 0
        %1230 = vmatpush1.bf16.msra.mxu0 %v1210
        %1231 = vmatprep.subr.bf16.mxu0 0
        %1232 = vmatpush1.bf16.msra.mxu0 %v1211
        %1233 = vmatprep.subr.bf16.mxu0 0
        %1234 = vmatpush1.bf16.msra.mxu0 %v1212
        %1235 = vmatprep.subr.bf16.mxu0 0
        %1236 = vmatpush1.bf16.msra.mxu0 %v1213
        %1237 = vmatprep.subr.bf16.mxu0 0
        %1238 = vmatpush1.bf16.msra.mxu0 %v1214
        %1239 = vmatprep.subr.bf16.mxu0 0
        %1240 = vmatpush1.bf16.msra.mxu0 0
        %1241 = vmatprep.subr.bf16.mxu0 0
        %1242 = vmatpush1.bf16.msra.mxu0 0
        %1243 = vmatprep.subr.bf16.mxu0 0
        %1244 = vmatpush1.bf16.msra.mxu0 0
        %1245 = vmatprep.subr.bf16.mxu0 0
        %1246 = vmatpush1.bf16.msra.mxu0 0
        %1247 = vmatprep.subr.bf16.mxu0 0
        %1248 = vmatpush1.bf16.msra.mxu0 0
        %1249 = vmatprep.subr.bf16.mxu0 0
        %1250 = vmatpush1.bf16.msra.mxu0 0
        %1251 = vmatprep.subr.bf16.mxu0 0
        %1252 = vmatpush1.bf16.msra.mxu0 0
        %1253 = vmatprep.subr.bf16.mxu0 0
        %1254 = vmatpush1.bf16.msra.mxu0 0
        %1255 = vmatprep.mubr.bf16.mxu0 0
        %1256 = vmatmul.mubr.bf16.gmra.mrb[0].mxu0 %v1149
        %v1257 = vpop.f32.mrb[0].mxu0
        %v1258 = vadd.f32 %v1173, %v1257
        %v1259 = vpop.f32.mrb[0].mxu0
        %v1260 = vpop.f32.mrb[0].mxu0
        %v1261 = vpop.f32.mrb[0].mxu0
        %1262 = vdwg.mxu0
        %1263 = vst [vmem:[%s373] sm:$0xff] %v1258
        %s1264 = sand.u32 %s193, 1
        %s1265 = scalar_lea.sflag [#allocation4], %s1264
        %s1266 = sand.u32 %s193, 1
        %s1267 = smul.addr %s1266, 8
        %s1268 = scalar_lea.vmem [#allocation11], %s1267
        // Predicated region
        $region69: #{tpu_custom_call.1} parent=47 // pred_check
          %p1269 = pneg %p203
        $region70: #{tpu_custom_call.1} parent=47 // pred_check_branch
          %1271 = sbr.rel (%p1269) target = $region72
        $region71: #{tpu_custom_call.1} parent=47 // pred_region
          %s1273 = ssub.s32 128, 128
          %1274 = vsyncadd %s1265, %s1273
          %s1275 = smul.addr %s28, 128
          %s1276 = scalar_lea.hbm %s7, %s1275
          %s1278 = sshll.u32 %s1268, 4
          %s1279 = int_to_ptr.vmem [resolvable:$true] %s1278
          %1281 = dma.vmem_to_hbm [thread:$0]  %s1279, 128, %s1276, %s1265
        $region72: #{tpu_custom_call.1} parent=47 // pred_fallthru
          _
      $region48: #{tpu_custom_call.1} parent=5 // pred_fallthru
        _
      %p1282 = scmp.le.s32.totalorder 2, %s23
      // Predicated region
      $region73: #{tpu_custom_call.1} parent=5 // pred_check
        %p1283 = pneg %p1282
      $region74: #{tpu_custom_call.1} parent=5 // pred_check_branch
        %1285 = sbr.rel (%p1283) target = $region76
      $region75: #{tpu_custom_call.1} parent=5 // pred_region
        %s1286 = ssub.s32 %s23, 2
        // Predicated region
        $region77: #{tpu_custom_call.1} parent=75 // pred_check
          %p1287 = pneg %p209
        $region78: #{tpu_custom_call.1} parent=75 // pred_check_branch
          %1289 = sbr.rel (%p1287) target = $region80
        $region79: #{tpu_custom_call.1} parent=75 // pred_region
          %s1290 = sand.u32 %s194, 1
          %s1291 = scalar_lea.sflag [#allocation4], %s1290
          %s1292 = sand.u32 %s194, 1
          %s1293 = smul.addr %s1292, 8
          %s1294 = scalar_lea.vmem [#allocation11], %s1293
          %1295 = dma.done %s1291, 128
        $region80: #{tpu_custom_call.1} parent=75 // pred_fallthru
          _
      $region76: #{tpu_custom_call.1} parent=5 // pred_fallthru
        _
    $region6: #{tpu_custom_call.1} parent=1 // loop_footer
      %s27 = sadd.s32 1, %s23
    $region7: #{tpu_custom_call.1} parent=1 // loop_footer_branch
      %22 = sbr.rel target = $region3
    $region8: #{tpu_custom_call.1} parent=1 // loop_exit
      _
    %1296 = vsyncpa [#allocation3], 1
    %s1297 = scalar_lea.sflag [#allocation3], 1
    %1298 = vsyncpa %s1297, 1
    %1299 = vsyncpa [#allocation6], 1
    %s1300 = scalar_lea.sflag [#allocation6], 1
    %1301 = vsyncpa %s1300, 1
    %1302 = vsyncpa [#allocation9], 1
    %1303 = vsyncpa [#allocation4], 1
    %s1304 = scalar_lea.sflag [#allocation4], 1
    %1305 = vsyncpa %s1304, 1

</llo_original>
